<compile_context>
chip_gen: v5e
topology: v5e:2x2
jax: 0.10.0
libtpu: 0.0.40
codegen_flags: <defaults>
</compile_context>

<pallas_src>
import functools

import jax
import jax.numpy as jnp
from jax.experimental import pallas as pl
from jax.experimental.pallas import tpu as pltpu


def _fourier_kernel(x_ref, b2_ref, phase_ref, o_ref, *, unroll_k: bool):
    x = x_ref[...].astype(jnp.float32)           # (tile_n, K)
    b2 = b2_ref[...].astype(jnp.float32)         # (K, 2M)
    if unroll_k:
        # Unrolled VPU broadcast-MAC (kept for A/B against the MXU path).
        k_dim = x.shape[1]
        acc = x[:, 0:1] * b2[0:1, :]
        for k in range(1, k_dim):
            acc = acc + x[:, k:k + 1] * b2[k:k + 1, :]
    else:
        # Small-K matmul on the MXU: keeps the K-MAC off the VALU, which is
        # saturated by the sin range-reduction + polynomial below.
        acc = jnp.dot(x, b2, preferred_element_type=jnp.float32)
    # cos folded into sin via the +pi/2 phase on the second half of the lanes.
    acc = acc + phase_ref[...]                   # phase is already float32
    o_ref[...] = jnp.sin(acc).astype(o_ref.dtype)


def _round_up(v: int, m: int) -> int:
    return ((v + m - 1) // m) * m


def fourier_feature_mapping(
    x,
    B,
    *,
    tile_n: int = 2048,
    out_dtype=None,
    unroll_k: bool = False,
    vmem_budget_bytes: int = 12 * 1024 * 1024,
):
    """x: (N, input_dim), B: (input_dim, mapping_size) -> (N, 2*mapping_size)."""
    N, input_dim = x.shape
    in_dim_b, mapping_size = B.shape
    assert in_dim_b == input_dim
    feat = 2 * mapping_size
    out_dtype = x.dtype if out_dtype is None else jnp.dtype(out_dtype)

    # Fold cos into sin: out = sin(x @ [B | B] + [0 | pi/2]).
    # phase is constructed in float32 regardless of B's dtype (it is added
    # after the in-kernel f32 cast; building it in bf16 would round pi/2).
    B2 = jnp.concatenate([B, B], axis=1)                                   # (K, 2M)
    phase = jnp.concatenate(
        [jnp.zeros((1, mapping_size), jnp.float32),
         jnp.full((1, mapping_size), jnp.pi / 2, jnp.float32)],
        axis=1,
    )                                                                       # (1, 2M)

    # Row alignment for the sublane tiling rule (16 for bf16 output, 8 for f32).
    row_align = 16 if jnp.dtype(out_dtype) == jnp.dtype(jnp.bfloat16) else 8

    if N < 2 * row_align:
        # Truly tiny input: one block whose row count equals the full array dim
        # (allowed exception to the (8,128) divisibility rule).
        tile_n_eff = N
    else:
        # At least 2 grid steps so ("parallel",) shards across both v7x TCs.
        tile_n_eff = max(row_align, min(tile_n, _round_up(pl.cdiv(N, 2), row_align)))

        def _vmem_bytes(t: int) -> int:
            out_b = t * feat * jnp.dtype(out_dtype).itemsize
            # x block is lane-padded to 128 lanes in VMEM regardless of K.
            x_b = t * _round_up(input_dim, 128) * x.dtype.itemsize
            b2_b = _round_up(input_dim, 8) * feat * B.dtype.itemsize
            ph_b = 8 * feat * 4
            # Inputs and output are double-buffered by the pipeline.
            return 2 * (out_b + x_b + b2_b + ph_b)

        while tile_n_eff > row_align and _vmem_bytes(tile_n_eff) > vmem_budget_bytes:
            tile_n_eff = max(row_align, _round_up(tile_n_eff // 2, row_align))

    n_tiles = pl.cdiv(N, tile_n_eff)

    kernel = functools.partial(_fourier_kernel, unroll_k=unroll_k)

    # Output is exactly (N, feat): the ragged last block's writeback is clipped
    # by Pallas, so no wrapper-side pad of x or out[:N] slice copy is needed.
    return pl.pallas_call(
        kernel,
        out_shape=jax.ShapeDtypeStruct((N, feat), out_dtype),
        grid_spec=pltpu.PrefetchScalarGridSpec(
            num_scalar_prefetch=0,
            grid=(n_tiles,),
            in_specs=[
                # x tile: (tile_n_eff, input_dim); input_dim equals the full
                # array dim so the (8,128) divisibility rule is satisfied.
                pl.BlockSpec((tile_n_eff, input_dim), lambda i: (i, 0)),
                # B2 and phase are tiny; keep them fully resident every step.
                pl.BlockSpec((input_dim, feat), lambda i: (0, 0)),
                pl.BlockSpec((1, feat), lambda i: (0, 0)),
            ],
            # Lane-dense output tile; stores are unmasked when feat % 128 == 0.
            out_specs=pl.BlockSpec((tile_n_eff, feat), lambda i: (i, 0)),
        ),
        compiler_params=pltpu.CompilerParams(
            dimension_semantics=("parallel",),  # shards grid across TCs on v7x
        ),
    )(x, B2, phase)


if __name__ == "__main__":
    # Module config (small, PINN-style 3-coordinate input).
    input_dim = 3
    mapping_size = 64          # feat = 128 -> lane-dense stores
    scale = 2.0
    N = 250                    # NOT a tile multiple: exercises the ragged last block

    key = jax.random.PRNGKey(0)
    k_x, k_b = jax.random.split(key)

    # Mirrors torch.randn(input_dim, mapping_size) * scale buffer init.
    B = jax.random.normal(k_b, (input_dim, mapping_size), dtype=jnp.float32) * scale
    x = jax.random.normal(k_x, (N, input_dim), dtype=jnp.float32)

    # Pure-JAX reference (same math as the torch forward).
    x_proj = x @ B
    ref = jnp.concatenate([jnp.sin(x_proj), jnp.cos(x_proj)], axis=-1)

    # Default path: MXU MAC, >=2 grid steps, no pad / no output slice.
    out = jax.block_until_ready(fourier_feature_mapping(x, B))
    assert out.shape == (N, 2 * mapping_size)
    # cos(t)=sin(t+pi/2) rewrite differs from ref only by ~1 ulp of argument
    # rounding — well inside this tolerance.
    assert jnp.allclose(out, ref, atol=1e-5, rtol=1e-5)

    # A/B path kept for bundle-dump comparison: unrolled VPU MAC.
    out_unrolled = jax.block_until_ready(fourier_feature_mapping(x, B, unroll_k=True))
    assert jnp.allclose(out_unrolled, ref, atol=1e-5, rtol=1e-5)

    # Tiny-N single-block path (block rows == full array dim).
    xs = x[:10]
    out_small = jax.block_until_ready(fourier_feature_mapping(xs, B))
    assert jnp.allclose(out_small, ref[:10], atol=1e-5, rtol=1e-5)

    print("KERNEL_OK")
</pallas_src>

<mosaic_0001>
module attributes {stable_mosaic.version = 11 : i64} {
  func.func @_fourier_kernel(%arg0: i32, %arg1: memref<128x3xf32, #tpu.memory_space<vmem>>, %arg2: memref<3x128xf32, #tpu.memory_space<vmem>>, %arg3: memref<1x128xf32, #tpu.memory_space<vmem>>, %arg4: memref<128x128xf32, #tpu.memory_space<vmem>>) attributes {dimension_semantics = [#tpu.dimension_semantics<parallel>], iteration_bounds = array<i64: 2>, scalar_prefetch = 0 : i64, scratch_operands = 0 : i64, tpu.core_type = #tpu.core_type<tc>, window_params = [{transform_indices = @transform_0, window_bounds = array<i64: 128, 3>}, {pipeline_mode = #tpu.pipeline_mode<synchronous>, transform_indices = @transform_1, window_bounds = array<i64: 3, 128>}, {pipeline_mode = #tpu.pipeline_mode<synchronous>, transform_indices = @transform_2, window_bounds = array<i64: 1, 128>}, {transform_indices = @transform_3, window_bounds = array<i64: 128, 128>}]} {
    %c0 = arith.constant 0 : index
    %c0_0 = arith.constant 0 : index
    %0 = vector.load %arg1[%c0, %c0_0] : memref<128x3xf32, #tpu.memory_space<vmem>>, vector<128x3xf32>
    %c0_1 = arith.constant 0 : index
    %c0_2 = arith.constant 0 : index
    %1 = vector.load %arg2[%c0_1, %c0_2] : memref<3x128xf32, #tpu.memory_space<vmem>>, vector<3x128xf32>
    %cst = arith.constant dense<0.000000e+00> : vector<128x128xf32>
    %2 = tpu.matmul %0, %1, %cst {dimension_numbers = #tpu.dot_dimension_numbers<[1], [0], [0], [1], [0, 0, 1, 1], [], []>} : vector<128x3xf32>, vector<3x128xf32>, vector<128x128xf32> -> vector<128x128xf32>
    %c0_3 = arith.constant 0 : index
    %c0_4 = arith.constant 0 : index
    %3 = vector.load %arg3[%c0_3, %c0_4] : memref<1x128xf32, #tpu.memory_space<vmem>>, vector<1x128xf32>
    %4 = vector.broadcast %3 : vector<1x128xf32> to vector<128x128xf32>
    %5 = arith.addf %2, %4 : vector<128x128xf32>
    %6 = math.sin %5 : vector<128x128xf32>
    %c0_5 = arith.constant 0 : index
    %c0_6 = arith.constant 0 : index
    %7 = vector.load %arg4[%c0_5, %c0_6] : memref<128x128xf32, #tpu.memory_space<vmem>>, vector<128x128xf32>
    tpu.vector_store %arg4[%c0_5, %c0_6], %6 {strides = array<i32>} : memref<128x128xf32, #tpu.memory_space<vmem>>, vector<128x128xf32>,
    return
  }
  func.func @transform_0(%arg0: i32) -> (i32, i32) {
    %c0_i32 = arith.constant 0 : i32
    %c0_i32_0 = arith.constant 0 : i32
    return %arg0, %c0_i32 : i32, i32
  }
  func.func @transform_1(%arg0: i32) -> (i32, i32) {
    %c0_i32 = arith.constant 0 : i32
    %c0_i32_0 = arith.constant 0 : i32
    %c0_i32_1 = arith.constant 0 : i32
    return %c0_i32, %c0_i32_0 : i32, i32
  }
  func.func @transform_2(%arg0: i32) -> (i32, i32) {
    %c0_i32 = arith.constant 0 : i32
    %c0_i32_0 = arith.constant 0 : i32
    %c0_i32_1 = arith.constant 0 : i32
    return %c0_i32, %c0_i32_0 : i32, i32
  }
  func.func @transform_3(%arg0: i32) -> (i32, i32) {
    %c0_i32 = arith.constant 0 : i32
    %c0_i32_0 = arith.constant 0 : i32
    return %arg0, %c0_i32 : i32, i32
  }
}

</mosaic_0001>

<llo_original>
// kernel: tpu_custom_call.1
$region0: #{tpu_custom_call.1}
  #allocation0 [shape = 'u32[]', space=smem, size = 0x4, offset = 0x4, fixed_abs, tag = 'smem constant byte address 0x4 - core index']
  #allocation1 [shape = 'u32[72,128]{1,0:T(1,128)}', space=vmem, size = 0x9000, scoped, tag = 'internal scratch']
  %s0 = inlined_call_operand.vmem [shape: f32[250,3], index: 0, kind: input, shape index: {}]
  %s1 = inlined_call_operand.vmem [shape: f32[3,128], index: 1, kind: input, shape index: {}]
  %s2 = inlined_call_operand.vmem [shape: f32[1,128], index: 2, kind: input, shape index: {}]
  %s3 = inlined_call_operand.hbm [shape: f32[250,128], index: 3, kind: output, shape index: {}]
  %s4 = sld [smem:[#allocation0]]
  $region45: #{tpu_custom_call.1} parent=0
    _
  %s6 = ssub.s32 1, %s4
  %s7 = scalar_select 0, %s6, %s4
  $region1: #{tpu_custom_call.1} parent=0
    #allocation2 [shape = 'u8[131072]{0}', space=vmem, size = 0x20000, scoped, tag = 'output window, operand 0']
    #allocation3 [shape = 's32[2]{0}', space=sflag, size = 0x8, scoped, tag = 'scoped memory for tpu_custom_call.1']
    %8 = vsyncpa [#allocation3], 0
    %s9 = scalar_lea.sflag [#allocation3], 1
    %10 = vsyncpa %s9, 0
    loop: start=0, step=1, limit=4
    $region2: #{tpu_custom_call.1} parent=1 // loop_pre_header
      _
    $region3: #{tpu_custom_call.1} parent=1 // loop_header
      %s12 = sphi 0, %s16
      %p13 = scmp.ge.s32.totalorder %s12, 4
      %s22 = sphi 0, %s24
      %s25 = sphi 0, %s22
      %s26 = sphi 0, %s25
      %s42 = sphi 0, %s26
      %s46 = sphi 0, %s46
      %s48 = sphi 0, %s46
      %s49 = sphi 0, %s48
      %s63 = sphi 0, %s49
      %s67 = sphi 0, %s67
      %s69 = sphi 0, %s67
      %s70 = sphi 0, %s69
      %s84 = sphi 0, %s70
      %s90 = sphi 0, %s92
      %s93 = sphi 0, %s90
      %s94 = sphi 0, %s93
      %s110 = sphi 0, %s94
    $region4: #{tpu_custom_call.1} parent=1 // loop_header_branch
      %15 = sbr.rel (%p13) target = $region8
    $region5: #{tpu_custom_call.1} parent=1 // loop_body
      %s17 = ssub.s32 %s12, 1
      %s18 = ssub.s32 %s12, 2
      %s19 = sadd.s32 %s12, 1
      %s20 = ssub.s32 %s12, %s19
      %p21 = scmp.eq.s32.totalorder %s20, 0
      %s23 = sadd.s32 %s22, 1
      %s24 = scalar_select %p21, %s22, %s23
      %p27 = pneg %p21
      %p28 = scmp.eq.s32.totalorder %s12, 1
      %p29 = por %p27, %p28
      %p30 = scmp.ne.s32.totalorder %s22, %s25
      %p31 = scmp.eq.s32.totalorder %s12, 0
      %p32 = por %p30, %p31
      %p33 = scmp.ne.s32.totalorder %s22, %s25
      %p34 = scmp.eq.s32.totalorder %s17, 1
      %p35 = por %p33, %p34
      %p36 = scmp.ne.s32.totalorder %s25, %s26
      %p37 = scmp.eq.s32.totalorder %s17, 0
      %p38 = por %p36, %p37
      %p39 = scmp.ne.s32.totalorder %s25, %s26
      %p40 = scmp.eq.s32.totalorder %s18, 1
      %p41 = por %p39, %p40
      %p43 = scmp.ne.s32.totalorder %s26, %s42
      %p44 = scmp.eq.s32.totalorder %s18, 0
      %p45 = por %p43, %p44
      %s47 = sadd.s32 %s46, 1
      %p50 = scmp.eq.s32.totalorder %s12, 1
      %p51 = scmp.ne.s32.totalorder %s46, %s48
      %p52 = scmp.eq.s32.totalorder %s12, 0
      %p53 = por %p51, %p52
      %p54 = scmp.ne.s32.totalorder %s46, %s48
      %p55 = scmp.eq.s32.totalorder %s17, 1
      %p56 = por %p54, %p55
      %p57 = scmp.ne.s32.totalorder %s48, %s49
      %p58 = scmp.eq.s32.totalorder %s17, 0
      %p59 = por %p57, %p58
      %p60 = scmp.ne.s32.totalorder %s48, %s49
      %p61 = scmp.eq.s32.totalorder %s18, 1
      %p62 = por %p60, %p61
      %p64 = scmp.ne.s32.totalorder %s49, %s63
      %p65 = scmp.eq.s32.totalorder %s18, 0
      %p66 = por %p64, %p65
      %s68 = sadd.s32 %s67, 1
      %p71 = scmp.eq.s32.totalorder %s12, 1
      %p72 = scmp.ne.s32.totalorder %s67, %s69
      %p73 = scmp.eq.s32.totalorder %s12, 0
      %p74 = por %p72, %p73
      %p75 = scmp.ne.s32.totalorder %s67, %s69
      %p76 = scmp.eq.s32.totalorder %s17, 1
      %p77 = por %p75, %p76
      %p78 = scmp.ne.s32.totalorder %s69, %s70
      %p79 = scmp.eq.s32.totalorder %s17, 0
      %p80 = por %p78, %p79
      %p81 = scmp.ne.s32.totalorder %s69, %s70
      %p82 = scmp.eq.s32.totalorder %s18, 1
      %p83 = por %p81, %p82
      %p85 = scmp.ne.s32.totalorder %s70, %s84
      %p86 = scmp.eq.s32.totalorder %s18, 0
      %p87 = por %p85, %p86
      %s88 = ssub.s32 %s12, %s19
      %p89 = scmp.eq.s32.totalorder %s88, 0
      %s91 = sadd.s32 %s90, 1
      %s92 = scalar_select %p89, %s90, %s91
      %p95 = pneg %p89
      %p96 = scmp.eq.s32.totalorder %s12, 1
      %p97 = por %p95, %p96
      %p98 = scmp.ne.s32.totalorder %s90, %s93
      %p99 = scmp.eq.s32.totalorder %s12, 0
      %p100 = por %p98, %p99
      %p101 = scmp.ne.s32.totalorder %s90, %s93
      %p102 = scmp.eq.s32.totalorder %s17, 1
      %p103 = por %p101, %p102
      %p104 = scmp.ne.s32.totalorder %s93, %s94
      %p105 = scmp.eq.s32.totalorder %s17, 0
      %p106 = por %p104, %p105
      %p107 = scmp.ne.s32.totalorder %s93, %s94
      %p108 = scmp.eq.s32.totalorder %s18, 1
      %p109 = por %p107, %p108
      %p111 = scmp.ne.s32.totalorder %s94, %s110
      %p112 = scmp.eq.s32.totalorder %s18, 0
      %p113 = por %p111, %p112
      %p114 = scmp.le.s32.totalorder 1, %s12
      %p115 = scmp.lt.s32.totalorder %s12, 3
      %p116 = pnand %p114, %p115
      %p117 = pneg %p116
      // Predicated region
      $region9: #{tpu_custom_call.1} parent=5 // pred_check
        _
      $region10: #{tpu_custom_call.1} parent=5 // pred_check_branch
        %119 = sbr.rel (%p116) target = $region12
      $region11: #{tpu_custom_call.1} parent=5 // pred_region
        %s120 = ssub.s32 %s12, 1
        // Predicated region
        $region13: #{tpu_custom_call.1} parent=11 // pred_check
          %p121 = pneg %p59
        $region14: #{tpu_custom_call.1} parent=11 // pred_check_branch
          %123 = sbr.rel (%p121) target = $region16
        $region15: #{tpu_custom_call.1} parent=11 // pred_region
          _
        $region16: #{tpu_custom_call.1} parent=11 // pred_fallthru
          _
        // Predicated region
        $region17: #{tpu_custom_call.1} parent=11 // pred_check
          %p124 = pneg %p80
        $region18: #{tpu_custom_call.1} parent=11 // pred_check_branch
          %126 = sbr.rel (%p124) target = $region20
        $region19: #{tpu_custom_call.1} parent=11 // pred_region
          _
        $region20: #{tpu_custom_call.1} parent=11 // pred_fallthru
          _
      $region12: #{tpu_custom_call.1} parent=5 // pred_fallthru
        _
      %p127 = scmp.lt.s32.totalorder %s12, 2
      // Predicated region
      $region21: #{tpu_custom_call.1} parent=5 // pred_check
        %p128 = pneg %p127
      $region22: #{tpu_custom_call.1} parent=5 // pred_check_branch
        %130 = sbr.rel (%p128) target = $region24
      $region23: #{tpu_custom_call.1} parent=5 // pred_region
        // Predicated region
        $region25: #{tpu_custom_call.1} parent=23 // pred_check
          %p131 = pneg %p32
        $region26: #{tpu_custom_call.1} parent=23 // pred_check_branch
          %133 = sbr.rel (%p131) target = $region28
        $region27: #{tpu_custom_call.1} parent=23 // pred_region
          %s134 = smul.u32 16, %s12
          %p135 = scmp.lt.s32.totalorder %s134, 31
          %s136 = scalar_select %p135, %s134, 31
          %s137 = smul.addr %s136, 8
          %s138 = scalar_lea.vmem %s0, %s137
          %s139 = smul.u32 16, %s12
        $region28: #{tpu_custom_call.1} parent=23 // pred_fallthru
          _
      $region24: #{tpu_custom_call.1} parent=5 // pred_fallthru
        _
      %p140 = scmp.le.s32.totalorder 1, %s12
      %p141 = scmp.lt.s32.totalorder %s12, 3
      %p142 = pnand %p140, %p141
      %p143 = pneg %p142
      // Predicated region
      $region29: #{tpu_custom_call.1} parent=5 // pred_check
        _
      $region30: #{tpu_custom_call.1} parent=5 // pred_check_branch
        %145 = sbr.rel (%p142) target = $region32
      $region31: #{tpu_custom_call.1} parent=5 // pred_region
        %s146 = ssub.s32 %s12, 1
        %s147 = smul.u32 16, %s17
        %p148 = scmp.lt.s32.totalorder %s147, 31
        %s149 = scalar_select %p148, %s147, 31
        %s150 = smul.addr %s149, 8
        %s151 = scalar_lea.vmem %s0, %s150
        %p152 = pneg %p38
        %p153 = pneg %p35
        %p154 = pneg %p59
        %p155 = pneg %p56
        %p156 = pneg %p80
        %p157 = pneg %p77
        %p158 = pneg %p106
        %p159 = pneg %p103
        %s160 = sand.u32 %s93, 1
        %s161 = scalar_lea.sflag [#allocation3], %s160
        %s162 = sand.u32 %s93, 1
        %s163 = smul.addr %s162, 128
        %s164 = scalar_lea.vmem [#allocation2], %s163
        %s165 = smul.u32 16, %s17
        %p166 = scmp.lt.s32.totalorder %s165, 31
        %s167 = scalar_select %p166, %s165, 31
        %s168 = smul.addr %s167, 8
        %s169 = scalar_lea.vmem %s0, %s168
        %s170 = smul.u32 16, %s17
        %s171 = smul.u32 16, %s17
        %v172 = vld [vmem:[%s169] sm:$0xff]
        %v173 = vld [vmem:[%s169 + $0x8] sm:$0xff]
        %v174 = vld [vmem:[%s169 + $0x10] sm:$0xff]
        %v175 = vld [vmem:[%s169 + $0x18] sm:$0xff]
        %v176 = vld [vmem:[%s169 + $0x20] sm:$0xff]
        %v177 = vld [vmem:[%s169 + $0x28] sm:$0xff]
        %v178 = vld [vmem:[%s169 + $0x30] sm:$0xff]
        %v179 = vld [vmem:[%s169 + $0x38] sm:$0xff]
        %v180 = vld [vmem:[%s169 + $0x40] sm:$0xff]
        %v181 = vld [vmem:[%s169 + $0x48] sm:$0xff]
        %v182 = vld [vmem:[%s169 + $0x50] sm:$0xff]
        %v183 = vld [vmem:[%s169 + $0x58] sm:$0xff]
        %v184 = vld [vmem:[%s169 + $0x60] sm:$0xff]
        %v185 = vld [vmem:[%s169 + $0x68] sm:$0xff]
        %v186 = vld [vmem:[%s169 + $0x70] sm:$0xff]
        %v187 = vld [vmem:[%s169 + $0x78] sm:$0xff]
        %v188 = vld [vmem:[%s1] sm:$0x7]
        %v189 = vld [vmem:[%s2] sm:$0x1]
        %v191 = vperm.slane %v189, 0
        %vm193 = vcmask 23552
        %v195 = vsel %vm193, %v172, 0
        %v198 = vsel %vm193, %v173, 0
        %v201 = vsel %vm193, %v174, 0
        %v204 = vsel %vm193, %v175, 0
        %v207 = vsel %vm193, %v176, 0
        %v210 = vsel %vm193, %v177, 0
        %v213 = vsel %vm193, %v178, 0
        %v216 = vsel %vm193, %v179, 0
        %v219 = vsel %vm193, %v180, 0
        %v222 = vsel %vm193, %v181, 0
        %v225 = vsel %vm193, %v182, 0
        %v228 = vsel %vm193, %v183, 0
        %v231 = vsel %vm193, %v184, 0
        %v234 = vsel %vm193, %v185, 0
        %v237 = vsel %vm193, %v186, 0
        %v240 = vsel %vm193, %v187, 0
        %vm242 = vcmask 1042432
        %v244 = vsel %vm242, %v188, 0
        %246 = vmatpush.msra.mxu0 0.0
        %247 = vmatpush.msra.mxu0 0.0
        %248 = vmatpush.msra.mxu0 0.0
        %249 = vmatpush.msra.mxu0 0.0
        %250 = vmatpush.msra.mxu0 0.0
        %251 = vmatpush.msra.mxu0 0.0
        %252 = vmatpush.msra.mxu0 0.0
        %253 = vmatpush.msra.mxu0 0.0
        %254 = vmatpush.msra.mxu0 0.0
        %255 = vmatpush.msra.mxu0 0.0
        %256 = vmatpush.msra.mxu0 0.0
        %257 = vmatpush.msra.mxu0 0.0
        %258 = vmatpush.msra.mxu0 0.0
        %259 = vmatpush.msra.mxu0 0.0
        %260 = vmatpush.msra.mxu0 0.0
        %261 = vmatpush.msra.mxu0 %v244
        %262 = vmatmul.f32.gmra.mxu0 %v195
        %v263 = vpop.f32.mrf.mxu0
        %v264 = vadd.f32 %v191, %v263
        %265 = vmatmul.f32.gmra.mxu0 %v198
        %v266 = vpop.f32.mrf.mxu0
        %v267 = vadd.f32 %v191, %v266
        %268 = vmatmul.f32.gmra.mxu0 %v201
        %v269 = vpop.f32.mrf.mxu0
        %v270 = vadd.f32 %v191, %v269
        %271 = vmatmul.f32.gmra.mxu0 %v204
        %v272 = vpop.f32.mrf.mxu0
        %v273 = vadd.f32 %v191, %v272
        %274 = vmatmul.f32.gmra.mxu0 %v207
        %v275 = vpop.f32.mrf.mxu0
        %v276 = vadd.f32 %v191, %v275
        %277 = vmatmul.f32.gmra.mxu0 %v210
        %v278 = vpop.f32.mrf.mxu0
        %v279 = vadd.f32 %v191, %v278
        %280 = vmatmul.f32.gmra.mxu0 %v213
        %v281 = vpop.f32.mrf.mxu0
        %v282 = vadd.f32 %v191, %v281
        %283 = vmatmul.f32.gmra.mxu0 %v216
        %v284 = vpop.f32.mrf.mxu0
        %v285 = vadd.f32 %v191, %v284
        %286 = vmatmul.f32.gmra.mxu0 %v219
        %v287 = vpop.f32.mrf.mxu0
        %v288 = vadd.f32 %v191, %v287
        %289 = vmatmul.f32.gmra.mxu0 %v222
        %v290 = vpop.f32.mrf.mxu0
        %v291 = vadd.f32 %v191, %v290
        %292 = vmatmul.f32.gmra.mxu0 %v225
        %v293 = vpop.f32.mrf.mxu0
        %v294 = vadd.f32 %v191, %v293
        %295 = vmatmul.f32.gmra.mxu0 %v228
        %v296 = vpop.f32.mrf.mxu0
        %v297 = vadd.f32 %v191, %v296
        %298 = vmatmul.f32.gmra.mxu0 %v231
        %v299 = vpop.f32.mrf.mxu0
        %v300 = vadd.f32 %v191, %v299
        %301 = vmatmul.f32.gmra.mxu0 %v234
        %v302 = vpop.f32.mrf.mxu0
        %v303 = vadd.f32 %v191, %v302
        %304 = vmatmul.f32.gmra.mxu0 %v237
        %v305 = vpop.f32.mrf.mxu0
        %v306 = vadd.f32 %v191, %v305
        %307 = vmatmul.f32.gmra.mxu0 %v240
        %v308 = vpop.f32.mrf.mxu0
        %v309 = vadd.f32 %v191, %v308
        %310 = vdwg.mxu0
        %v311 = vand.u32 2147483647, %v264
        %vm312 = vcmp.le.f32.partialorder %v311, 0.7853982
        %vm313 = vcmp.lt.s32.totalorder %v264, 0
        %v314 = vand.u32 %v264, 2139095040
        %v315 = vshrl.u32 %v314, 23
        %v316 = vsub.s32 %v315, 127
        %v317 = vand.u32 2147483647, %v264
        %v318 = vand.u32 %v317, 8388607
        %v319 = vor.u32 %v318, 8388608
        %v320 = vsub.s32 0, %v319
        %v321 = vadd.s32 %v316, 1
        %vm322 = vcmp.gt.s32.totalorder %v321, 0
        %v323 = vsel %vm322, %v321, 0
        %v324 = vshrl.u32 %v323, 5
        %v325 = vand.u32 %v323, 31
        %v326 = vsub.s32 32, %v325
        %v327 = vshrl.u32 683565275, %v326
        %v328 = vshll.u32 683565275, %v325
        %v329 = vshrl.u32 2475754826, %v326
        %v330 = vor.u32 %v328, %v329
        %v331 = vshll.u32 2475754826, %v325
        %v332 = vshrl.u32 2131351028, %v326
        %v333 = vor.u32 %v331, %v332
        %v334 = vshll.u32 2131351028, %v325
        %v335 = vshrl.u32 2102212464, %v326
        %v336 = vor.u32 %v334, %v335
        %v337 = vshll.u32 2102212464, %v325
        %v338 = vshrl.u32 920167782, %v326
        %v339 = vor.u32 %v337, %v338
        %v340 = vshll.u32 920167782, %v325
        %v341 = vshrl.u32 1326507024, %v326
        %v342 = vor.u32 %v340, %v341
        %vm343 = vcmp.lt.s32.totalorder %v324, 1
        %vm344 = vcmp.lt.s32.totalorder %v324, 2
        %vm345 = vcmp.lt.s32.totalorder %v324, 3
        %vm346 = vcmp.lt.s32.totalorder %v324, 4
        %v347 = vsel %vm343, %v327, %v330
        %v348 = vsel %vm346, %v336, 2102212464
        %v349 = vsel %vm345, %v333, %v348
        %v350 = vsel %vm344, %v347, %v349
        %v351 = vsel %vm343, %v330, %v333
        %v352 = vsel %vm346, %v339, 920167782
        %v353 = vsel %vm345, %v336, %v352
        %v354 = vsel %vm344, %v351, %v353
        %v355 = vsel %vm343, %v333, %v336
        %v356 = vsel %vm346, %v342, 1326507024
        %v357 = vsel %vm345, %v339, %v356
        %v358 = vsel %vm344, %v355, %v357
        %v359 = vshll.u32 %v319, 8
        %v360 = vand.u32 %v359, 65535
        %v361 = vshrl.u32 %v359, 16
        %v362 = vand.u32 %v358, 65535
        %v363 = vshrl.u32 %v358, 16
        %v364 = vmul.u32 %v360, %v362
        %v365 = vmul.u32 %v360, %v363
        %v366 = vmul.u32 %v361, %v362
        %v367 = vmul.u32 %v361, %v363
        %v368 = vshll.u32 %v365, 16
        %v369 = vshrl.u32 %v365, 16
        %v370 = vshll.u32 %v366, 16
        %v371 = vshrl.u32 %v366, 16
        %vm372 = vc.u32 %v364, %v368
        %v373 = vsel %vm372, 1, 0
        %v374 = vadd.s32 %v364, %v368
        %v375 = vadd.s32 %v367, %v373
        %vm376 = vc.u32 %v374, %v370
        %v377 = vsel %vm376, 1, 0
        %v378 = vadd.s32 %v374, %v370
        %v379 = vadd.s32 %v375, %v377
        %v380 = vadd.s32 %v379, %v369
        %v381 = vadd.s32 %v380, %v371
        %v382 = vand.u32 %v359, 65535
        %v383 = vshrl.u32 %v359, 16
        %v384 = vand.u32 %v354, 65535
        %v385 = vshrl.u32 %v354, 16
        %v386 = vmul.u32 %v382, %v384
        %v387 = vmul.u32 %v382, %v385
        %v388 = vmul.u32 %v383, %v384
        %v389 = vmul.u32 %v383, %v385
        %v390 = vshll.u32 %v387, 16
        %v391 = vshrl.u32 %v387, 16
        %v392 = vshll.u32 %v388, 16
        %v393 = vshrl.u32 %v388, 16
        %vm394 = vc.u32 %v386, %v390
        %v395 = vsel %vm394, 1, 0
        %v396 = vadd.s32 %v386, %v390
        %v397 = vadd.s32 %v389, %v395
        %vm398 = vc.u32 %v396, %v392
        %v399 = vsel %vm398, 1, 0
        %v400 = vadd.s32 %v396, %v392
        %v401 = vadd.s32 %v397, %v399
        %v402 = vadd.s32 %v401, %v391
        %v403 = vadd.s32 %v402, %v393
        %v404 = vmul.u32 %v359, %v350
        %v405 = vadd.s32 %v381, %v400
        %vm406 = vc.u32 %v381, %v400
        %v407 = vadd.s32 %v403, 1
        %v408 = vsel %vm406, %v407, %v403
        %v409 = vadd.s32 %v404, %v408
        %v410 = vadd.s32 %v409, 536870912
        %v411 = vshrl.u32 %v410, 30
        %v412 = vshll.u32 %v411, 30
        %v413 = vsub.s32 %v409, %v412
        %vm414 = vcmp.lt.s32.totalorder %v413, 0
        %v415 = vsub.s32 0, %v413
        %v416 = vsel %vm414, %v415, %v413
        %v417 = vclz %v416
        %v418 = vsub.s32 %v417, 2
        %vm419 = vcmp.gt.s32.totalorder 0, %v418
        %v420 = vsel %vm419, 0, %v418
        %v421 = vsub.s32 32, %v420
        %v422 = vshll.u32 %v413, %v420
        %v423 = vshrl.u32 %v405, %v421
        %v424 = vor.u32 %v422, %v423
        %v425 = vsub.s32 4294967266, %v420
        %v426 = vadd.s32 %v425, 127
        %v427 = vshll.u32 %v426, 23
        %v428 = vor.u32 4788187, %v427
        %v429 = vand.u32 2147483647, %v428
        %v431 = vcvt.s32.f32 %v424
        %v432 = vmul.f32 %v431, %v429
        %v433 = vxor.u32 %v432, 2147483648
        %v434 = vsel %vm313, %v433, %v432
        %v435 = vsub.s32 4, %v411
        %v436 = vsel %vm313, %v435, %v411
        %v437 = vsel %vm312, %v264, %v434
        %v438 = vsel %vm312, 0, %v436
        %v439 = vmul.f32 %v437, %v437
        %v440 = vmul.f32 %v439, -0.001358992
        %v441 = vadd.f32 %v440, 0.041655596
        %v442 = vmul.f32 %v439, %v441
        %v443 = vadd.f32 %v442, -0.4999988
        %v444 = vmul.f32 %v439, %v443
        %v445 = vadd.f32 1.0, %v444
        %v446 = vmul.f32 %v437, %v437
        %v447 = vmul.f32 %v446, -0.00019511016
        %v448 = vadd.f32 %v447, 0.008332121
        %v449 = vmul.f32 %v446, %v448
        %v450 = vadd.f32 %v449, -0.16666654
        %v451 = vmul.f32 %v446, %v450
        %v452 = vadd.f32 %v451, 1.0
        %v453 = vmul.f32 %v452, %v437
        %vm454 = vweird.f32 %v264
        %v455 = vadd.s32 %v438, 3
        %v456 = vand.u32 %v455, 3
        %vm457 = vcmp.lt.s32.totalorder %v456, 2
        %vm458 = vcmp.eq.s32.totalorder %v456, 0
        %v459 = vxor.u32 %v453, 2147483648
        %v460 = vsel %vm458, %v445, %v459
        %vm461 = vcmp.eq.s32.totalorder %v456, 2
        %v462 = vxor.u32 %v445, 2147483648
        %v463 = vsel %vm461, %v462, %v453
        %v464 = vsel %vm457, %v460, %v463
        %v465 = vsel %vm454, nan, %v464
        %v466 = vand.u32 2147483647, %v267
        %vm467 = vcmp.le.f32.partialorder %v466, 0.7853982
        %vm468 = vcmp.lt.s32.totalorder %v267, 0
        %v469 = vand.u32 %v267, 2139095040
        %v470 = vshrl.u32 %v469, 23
        %v471 = vsub.s32 %v470, 127
        %v472 = vand.u32 2147483647, %v267
        %v473 = vand.u32 %v472, 8388607
        %v474 = vor.u32 %v473, 8388608
        %v475 = vsub.s32 0, %v474
        %v476 = vadd.s32 %v471, 1
        %vm477 = vcmp.gt.s32.totalorder %v476, 0
        %v478 = vsel %vm477, %v476, 0
        %v479 = vshrl.u32 %v478, 5
        %v480 = vand.u32 %v478, 31
        %v481 = vsub.s32 32, %v480
        %v482 = vshrl.u32 683565275, %v481
        %v483 = vshll.u32 683565275, %v480
        %v484 = vshrl.u32 2475754826, %v481
        %v485 = vor.u32 %v483, %v484
        %v486 = vshll.u32 2475754826, %v480
        %v487 = vshrl.u32 2131351028, %v481
        %v488 = vor.u32 %v486, %v487
        %v489 = vshll.u32 2131351028, %v480
        %v490 = vshrl.u32 2102212464, %v481
        %v491 = vor.u32 %v489, %v490
        %v492 = vshll.u32 2102212464, %v480
        %v493 = vshrl.u32 920167782, %v481
        %v494 = vor.u32 %v492, %v493
        %v495 = vshll.u32 920167782, %v480
        %v496 = vshrl.u32 1326507024, %v481
        %v497 = vor.u32 %v495, %v496
        %vm498 = vcmp.lt.s32.totalorder %v479, 1
        %vm499 = vcmp.lt.s32.totalorder %v479, 2
        %vm500 = vcmp.lt.s32.totalorder %v479, 3
        %vm501 = vcmp.lt.s32.totalorder %v479, 4
        %v502 = vsel %vm498, %v482, %v485
        %v503 = vsel %vm501, %v491, 2102212464
        %v504 = vsel %vm500, %v488, %v503
        %v505 = vsel %vm499, %v502, %v504
        %v506 = vsel %vm498, %v485, %v488
        %v507 = vsel %vm501, %v494, 920167782
        %v508 = vsel %vm500, %v491, %v507
        %v509 = vsel %vm499, %v506, %v508
        %v510 = vsel %vm498, %v488, %v491
        %v511 = vsel %vm501, %v497, 1326507024
        %v512 = vsel %vm500, %v494, %v511
        %v513 = vsel %vm499, %v510, %v512
        %v514 = vshll.u32 %v474, 8
        %v515 = vand.u32 %v514, 65535
        %v516 = vshrl.u32 %v514, 16
        %v517 = vand.u32 %v513, 65535
        %v518 = vshrl.u32 %v513, 16
        %v519 = vmul.u32 %v515, %v517
        %v520 = vmul.u32 %v515, %v518
        %v521 = vmul.u32 %v516, %v517
        %v522 = vmul.u32 %v516, %v518
        %v523 = vshll.u32 %v520, 16
        %v524 = vshrl.u32 %v520, 16
        %v525 = vshll.u32 %v521, 16
        %v526 = vshrl.u32 %v521, 16
        %vm527 = vc.u32 %v519, %v523
        %v528 = vsel %vm527, 1, 0
        %v529 = vadd.s32 %v519, %v523
        %v530 = vadd.s32 %v522, %v528
        %vm531 = vc.u32 %v529, %v525
        %v532 = vsel %vm531, 1, 0
        %v533 = vadd.s32 %v529, %v525
        %v534 = vadd.s32 %v530, %v532
        %v535 = vadd.s32 %v534, %v524
        %v536 = vadd.s32 %v535, %v526
        %v537 = vand.u32 %v514, 65535
        %v538 = vshrl.u32 %v514, 16
        %v539 = vand.u32 %v509, 65535
        %v540 = vshrl.u32 %v509, 16
        %v541 = vmul.u32 %v537, %v539
        %v542 = vmul.u32 %v537, %v540
        %v543 = vmul.u32 %v538, %v539
        %v544 = vmul.u32 %v538, %v540
        %v545 = vshll.u32 %v542, 16
        %v546 = vshrl.u32 %v542, 16
        %v547 = vshll.u32 %v543, 16
        %v548 = vshrl.u32 %v543, 16
        %vm549 = vc.u32 %v541, %v545
        %v550 = vsel %vm549, 1, 0
        %v551 = vadd.s32 %v541, %v545
        %v552 = vadd.s32 %v544, %v550
        %vm553 = vc.u32 %v551, %v547
        %v554 = vsel %vm553, 1, 0
        %v555 = vadd.s32 %v551, %v547
        %v556 = vadd.s32 %v552, %v554
        %v557 = vadd.s32 %v556, %v546
        %v558 = vadd.s32 %v557, %v548
        %v559 = vmul.u32 %v514, %v505
        %v560 = vadd.s32 %v536, %v555
        %vm561 = vc.u32 %v536, %v555
        %v562 = vadd.s32 %v558, 1
        %v563 = vsel %vm561, %v562, %v558
        %v564 = vadd.s32 %v559, %v563
        %v565 = vadd.s32 %v564, 536870912
        %v566 = vshrl.u32 %v565, 30
        %v567 = vshll.u32 %v566, 30
        %v568 = vsub.s32 %v564, %v567
        %vm569 = vcmp.lt.s32.totalorder %v568, 0
        %v570 = vsub.s32 0, %v568
        %v571 = vsel %vm569, %v570, %v568
        %v572 = vclz %v571
        %v573 = vsub.s32 %v572, 2
        %vm574 = vcmp.gt.s32.totalorder 0, %v573
        %v575 = vsel %vm574, 0, %v573
        %v576 = vsub.s32 32, %v575
        %v577 = vshll.u32 %v568, %v575
        %v578 = vshrl.u32 %v560, %v576
        %v579 = vor.u32 %v577, %v578
        %v580 = vsub.s32 4294967266, %v575
        %v581 = vadd.s32 %v580, 127
        %v582 = vshll.u32 %v581, 23
        %v583 = vor.u32 4788187, %v582
        %v584 = vand.u32 2147483647, %v583
        %v586 = vcvt.s32.f32 %v579
        %v587 = vmul.f32 %v586, %v584
        %v588 = vxor.u32 %v587, 2147483648
        %v589 = vsel %vm468, %v588, %v587
        %v590 = vsub.s32 4, %v566
        %v591 = vsel %vm468, %v590, %v566
        %v592 = vsel %vm467, %v267, %v589
        %v593 = vsel %vm467, 0, %v591
        %v594 = vmul.f32 %v592, %v592
        %v595 = vmul.f32 %v594, -0.001358992
        %v596 = vadd.f32 %v595, 0.041655596
        %v597 = vmul.f32 %v594, %v596
        %v598 = vadd.f32 %v597, -0.4999988
        %v599 = vmul.f32 %v594, %v598
        %v600 = vadd.f32 1.0, %v599
        %v601 = vmul.f32 %v592, %v592
        %v602 = vmul.f32 %v601, -0.00019511016
        %v603 = vadd.f32 %v602, 0.008332121
        %v604 = vmul.f32 %v601, %v603
        %v605 = vadd.f32 %v604, -0.16666654
        %v606 = vmul.f32 %v601, %v605
        %v607 = vadd.f32 %v606, 1.0
        %v608 = vmul.f32 %v607, %v592
        %vm609 = vweird.f32 %v267
        %v610 = vadd.s32 %v593, 3
        %v611 = vand.u32 %v610, 3
        %vm612 = vcmp.lt.s32.totalorder %v611, 2
        %vm613 = vcmp.eq.s32.totalorder %v611, 0
        %v614 = vxor.u32 %v608, 2147483648
        %v615 = vsel %vm613, %v600, %v614
        %vm616 = vcmp.eq.s32.totalorder %v611, 2
        %v617 = vxor.u32 %v600, 2147483648
        %v618 = vsel %vm616, %v617, %v608
        %v619 = vsel %vm612, %v615, %v618
        %v620 = vsel %vm609, nan, %v619
        %v621 = vand.u32 2147483647, %v270
        %vm622 = vcmp.le.f32.partialorder %v621, 0.7853982
        %vm623 = vcmp.lt.s32.totalorder %v270, 0
        %v624 = vand.u32 %v270, 2139095040
        %v625 = vshrl.u32 %v624, 23
        %v626 = vsub.s32 %v625, 127
        %v627 = vand.u32 2147483647, %v270
        %v628 = vand.u32 %v627, 8388607
        %v629 = vor.u32 %v628, 8388608
        %v630 = vsub.s32 0, %v629
        %v631 = vadd.s32 %v626, 1
        %vm632 = vcmp.gt.s32.totalorder %v631, 0
        %v633 = vsel %vm632, %v631, 0
        %v634 = vshrl.u32 %v633, 5
        %v635 = vand.u32 %v633, 31
        %v636 = vsub.s32 32, %v635
        %v637 = vshrl.u32 683565275, %v636
        %v638 = vshll.u32 683565275, %v635
        %v639 = vshrl.u32 2475754826, %v636
        %v640 = vor.u32 %v638, %v639
        %v641 = vshll.u32 2475754826, %v635
        %v642 = vshrl.u32 2131351028, %v636
        %v643 = vor.u32 %v641, %v642
        %v644 = vshll.u32 2131351028, %v635
        %v645 = vshrl.u32 2102212464, %v636
        %v646 = vor.u32 %v644, %v645
        %v647 = vshll.u32 2102212464, %v635
        %v648 = vshrl.u32 920167782, %v636
        %v649 = vor.u32 %v647, %v648
        %v650 = vshll.u32 920167782, %v635
        %v651 = vshrl.u32 1326507024, %v636
        %v652 = vor.u32 %v650, %v651
        %vm653 = vcmp.lt.s32.totalorder %v634, 1
        %vm654 = vcmp.lt.s32.totalorder %v634, 2
        %vm655 = vcmp.lt.s32.totalorder %v634, 3
        %vm656 = vcmp.lt.s32.totalorder %v634, 4
        %v657 = vsel %vm653, %v637, %v640
        %v658 = vsel %vm656, %v646, 2102212464
        %v659 = vsel %vm655, %v643, %v658
        %v660 = vsel %vm654, %v657, %v659
        %v661 = vsel %vm653, %v640, %v643
        %v662 = vsel %vm656, %v649, 920167782
        %v663 = vsel %vm655, %v646, %v662
        %v664 = vsel %vm654, %v661, %v663
        %v665 = vsel %vm653, %v643, %v646
        %v666 = vsel %vm656, %v652, 1326507024
        %v667 = vsel %vm655, %v649, %v666
        %v668 = vsel %vm654, %v665, %v667
        %v669 = vshll.u32 %v629, 8
        %v670 = vand.u32 %v669, 65535
        %v671 = vshrl.u32 %v669, 16
        %v672 = vand.u32 %v668, 65535
        %v673 = vshrl.u32 %v668, 16
        %v674 = vmul.u32 %v670, %v672
        %v675 = vmul.u32 %v670, %v673
        %v676 = vmul.u32 %v671, %v672
        %v677 = vmul.u32 %v671, %v673
        %v678 = vshll.u32 %v675, 16
        %v679 = vshrl.u32 %v675, 16
        %v680 = vshll.u32 %v676, 16
        %v681 = vshrl.u32 %v676, 16
        %vm682 = vc.u32 %v674, %v678
        %v683 = vsel %vm682, 1, 0
        %v684 = vadd.s32 %v674, %v678
        %v685 = vadd.s32 %v677, %v683
        %vm686 = vc.u32 %v684, %v680
        %v687 = vsel %vm686, 1, 0
        %v688 = vadd.s32 %v684, %v680
        %v689 = vadd.s32 %v685, %v687
        %v690 = vadd.s32 %v689, %v679
        %v691 = vadd.s32 %v690, %v681
        %v692 = vand.u32 %v669, 65535
        %v693 = vshrl.u32 %v669, 16
        %v694 = vand.u32 %v664, 65535
        %v695 = vshrl.u32 %v664, 16
        %v696 = vmul.u32 %v692, %v694
        %v697 = vmul.u32 %v692, %v695
        %v698 = vmul.u32 %v693, %v694
        %v699 = vmul.u32 %v693, %v695
        %v700 = vshll.u32 %v697, 16
        %v701 = vshrl.u32 %v697, 16
        %v702 = vshll.u32 %v698, 16
        %v703 = vshrl.u32 %v698, 16
        %vm704 = vc.u32 %v696, %v700
        %v705 = vsel %vm704, 1, 0
        %v706 = vadd.s32 %v696, %v700
        %v707 = vadd.s32 %v699, %v705
        %vm708 = vc.u32 %v706, %v702
        %v709 = vsel %vm708, 1, 0
        %v710 = vadd.s32 %v706, %v702
        %v711 = vadd.s32 %v707, %v709
        %v712 = vadd.s32 %v711, %v701
        %v713 = vadd.s32 %v712, %v703
        %v714 = vmul.u32 %v669, %v660
        %v715 = vadd.s32 %v691, %v710
        %vm716 = vc.u32 %v691, %v710
        %v717 = vadd.s32 %v713, 1
        %v718 = vsel %vm716, %v717, %v713
        %v719 = vadd.s32 %v714, %v718
        %v720 = vadd.s32 %v719, 536870912
        %v721 = vshrl.u32 %v720, 30
        %v722 = vshll.u32 %v721, 30
        %v723 = vsub.s32 %v719, %v722
        %vm724 = vcmp.lt.s32.totalorder %v723, 0
        %v725 = vsub.s32 0, %v723
        %v726 = vsel %vm724, %v725, %v723
        %v727 = vclz %v726
        %v728 = vsub.s32 %v727, 2
        %vm729 = vcmp.gt.s32.totalorder 0, %v728
        %v730 = vsel %vm729, 0, %v728
        %v731 = vsub.s32 32, %v730
        %v732 = vshll.u32 %v723, %v730
        %v733 = vshrl.u32 %v715, %v731
        %v734 = vor.u32 %v732, %v733
        %v735 = vsub.s32 4294967266, %v730
        %v736 = vadd.s32 %v735, 127
        %v737 = vshll.u32 %v736, 23
        %v738 = vor.u32 4788187, %v737
        %v739 = vand.u32 2147483647, %v738
        %v741 = vcvt.s32.f32 %v734
        %v742 = vmul.f32 %v741, %v739
        %v743 = vxor.u32 %v742, 2147483648
        %v744 = vsel %vm623, %v743, %v742
        %v745 = vsub.s32 4, %v721
        %v746 = vsel %vm623, %v745, %v721
        %v747 = vsel %vm622, %v270, %v744
        %v748 = vsel %vm622, 0, %v746
        %v749 = vmul.f32 %v747, %v747
        %v750 = vmul.f32 %v749, -0.001358992
        %v751 = vadd.f32 %v750, 0.041655596
        %v752 = vmul.f32 %v749, %v751
        %v753 = vadd.f32 %v752, -0.4999988
        %v754 = vmul.f32 %v749, %v753
        %v755 = vadd.f32 1.0, %v754
        %v756 = vmul.f32 %v747, %v747
        %v757 = vmul.f32 %v756, -0.00019511016
        %v758 = vadd.f32 %v757, 0.008332121
        %v759 = vmul.f32 %v756, %v758
        %v760 = vadd.f32 %v759, -0.16666654
        %v761 = vmul.f32 %v756, %v760
        %v762 = vadd.f32 %v761, 1.0
        %v763 = vmul.f32 %v762, %v747
        %vm764 = vweird.f32 %v270
        %v765 = vadd.s32 %v748, 3
        %v766 = vand.u32 %v765, 3
        %vm767 = vcmp.lt.s32.totalorder %v766, 2
        %vm768 = vcmp.eq.s32.totalorder %v766, 0
        %v769 = vxor.u32 %v763, 2147483648
        %v770 = vsel %vm768, %v755, %v769
        %vm771 = vcmp.eq.s32.totalorder %v766, 2
        %v772 = vxor.u32 %v755, 2147483648
        %v773 = vsel %vm771, %v772, %v763
        %v774 = vsel %vm767, %v770, %v773
        %v775 = vsel %vm764, nan, %v774
        %v776 = vand.u32 2147483647, %v273
        %vm777 = vcmp.le.f32.partialorder %v776, 0.7853982
        %vm778 = vcmp.lt.s32.totalorder %v273, 0
        %v779 = vand.u32 %v273, 2139095040
        %v780 = vshrl.u32 %v779, 23
        %v781 = vsub.s32 %v780, 127
        %v782 = vand.u32 2147483647, %v273
        %v783 = vand.u32 %v782, 8388607
        %v784 = vor.u32 %v783, 8388608
        %v785 = vsub.s32 0, %v784
        %v786 = vadd.s32 %v781, 1
        %vm787 = vcmp.gt.s32.totalorder %v786, 0
        %v788 = vsel %vm787, %v786, 0
        %v789 = vshrl.u32 %v788, 5
        %v790 = vand.u32 %v788, 31
        %v791 = vsub.s32 32, %v790
        %v792 = vshrl.u32 683565275, %v791
        %v793 = vshll.u32 683565275, %v790
        %v794 = vshrl.u32 2475754826, %v791
        %v795 = vor.u32 %v793, %v794
        %v796 = vshll.u32 2475754826, %v790
        %v797 = vshrl.u32 2131351028, %v791
        %v798 = vor.u32 %v796, %v797
        %v799 = vshll.u32 2131351028, %v790
        %v800 = vshrl.u32 2102212464, %v791
        %v801 = vor.u32 %v799, %v800
        %v802 = vshll.u32 2102212464, %v790
        %v803 = vshrl.u32 920167782, %v791
        %v804 = vor.u32 %v802, %v803
        %v805 = vshll.u32 920167782, %v790
        %v806 = vshrl.u32 1326507024, %v791
        %v807 = vor.u32 %v805, %v806
        %vm808 = vcmp.lt.s32.totalorder %v789, 1
        %vm809 = vcmp.lt.s32.totalorder %v789, 2
        %vm810 = vcmp.lt.s32.totalorder %v789, 3
        %vm811 = vcmp.lt.s32.totalorder %v789, 4
        %v812 = vsel %vm808, %v792, %v795
        %v813 = vsel %vm811, %v801, 2102212464
        %v814 = vsel %vm810, %v798, %v813
        %v815 = vsel %vm809, %v812, %v814
        %v816 = vsel %vm808, %v795, %v798
        %v817 = vsel %vm811, %v804, 920167782
        %v818 = vsel %vm810, %v801, %v817
        %v819 = vsel %vm809, %v816, %v818
        %v820 = vsel %vm808, %v798, %v801
        %v821 = vsel %vm811, %v807, 1326507024
        %v822 = vsel %vm810, %v804, %v821
        %v823 = vsel %vm809, %v820, %v822
        %v824 = vshll.u32 %v784, 8
        %v825 = vand.u32 %v824, 65535
        %v826 = vshrl.u32 %v824, 16
        %v827 = vand.u32 %v823, 65535
        %v828 = vshrl.u32 %v823, 16
        %v829 = vmul.u32 %v825, %v827
        %v830 = vmul.u32 %v825, %v828
        %v831 = vmul.u32 %v826, %v827
        %v832 = vmul.u32 %v826, %v828
        %v833 = vshll.u32 %v830, 16
        %v834 = vshrl.u32 %v830, 16
        %v835 = vshll.u32 %v831, 16
        %v836 = vshrl.u32 %v831, 16
        %vm837 = vc.u32 %v829, %v833
        %v838 = vsel %vm837, 1, 0
        %v839 = vadd.s32 %v829, %v833
        %v840 = vadd.s32 %v832, %v838
        %vm841 = vc.u32 %v839, %v835
        %v842 = vsel %vm841, 1, 0
        %v843 = vadd.s32 %v839, %v835
        %v844 = vadd.s32 %v840, %v842
        %v845 = vadd.s32 %v844, %v834
        %v846 = vadd.s32 %v845, %v836
        %v847 = vand.u32 %v824, 65535
        %v848 = vshrl.u32 %v824, 16
        %v849 = vand.u32 %v819, 65535
        %v850 = vshrl.u32 %v819, 16
        %v851 = vmul.u32 %v847, %v849
        %v852 = vmul.u32 %v847, %v850
        %v853 = vmul.u32 %v848, %v849
        %v854 = vmul.u32 %v848, %v850
        %v855 = vshll.u32 %v852, 16
        %v856 = vshrl.u32 %v852, 16
        %v857 = vshll.u32 %v853, 16
        %v858 = vshrl.u32 %v853, 16
        %vm859 = vc.u32 %v851, %v855
        %v860 = vsel %vm859, 1, 0
        %v861 = vadd.s32 %v851, %v855
        %v862 = vadd.s32 %v854, %v860
        %vm863 = vc.u32 %v861, %v857
        %v864 = vsel %vm863, 1, 0
        %v865 = vadd.s32 %v861, %v857
        %v866 = vadd.s32 %v862, %v864
        %v867 = vadd.s32 %v866, %v856
        %v868 = vadd.s32 %v867, %v858
        %v869 = vmul.u32 %v824, %v815
        %v870 = vadd.s32 %v846, %v865
        %vm871 = vc.u32 %v846, %v865
        %v872 = vadd.s32 %v868, 1
        %v873 = vsel %vm871, %v872, %v868
        %v874 = vadd.s32 %v869, %v873
        %v875 = vadd.s32 %v874, 536870912
        %v876 = vshrl.u32 %v875, 30
        %v877 = vshll.u32 %v876, 30
        %v878 = vsub.s32 %v874, %v877
        %vm879 = vcmp.lt.s32.totalorder %v878, 0
        %v880 = vsub.s32 0, %v878
        %v881 = vsel %vm879, %v880, %v878
        %v882 = vclz %v881
        %v883 = vsub.s32 %v882, 2
        %vm884 = vcmp.gt.s32.totalorder 0, %v883
        %v885 = vsel %vm884, 0, %v883
        %v886 = vsub.s32 32, %v885
        %v887 = vshll.u32 %v878, %v885
        %v888 = vshrl.u32 %v870, %v886
        %v889 = vor.u32 %v887, %v888
        %v890 = vsub.s32 4294967266, %v885
        %v891 = vadd.s32 %v890, 127
        %v892 = vshll.u32 %v891, 23
        %v893 = vor.u32 4788187, %v892
        %v894 = vand.u32 2147483647, %v893
        %v896 = vcvt.s32.f32 %v889
        %v897 = vmul.f32 %v896, %v894
        %v898 = vxor.u32 %v897, 2147483648
        %v899 = vsel %vm778, %v898, %v897
        %v900 = vsub.s32 4, %v876
        %v901 = vsel %vm778, %v900, %v876
        %v902 = vsel %vm777, %v273, %v899
        %v903 = vsel %vm777, 0, %v901
        %v904 = vmul.f32 %v902, %v902
        %v905 = vmul.f32 %v904, -0.001358992
        %v906 = vadd.f32 %v905, 0.041655596
        %v907 = vmul.f32 %v904, %v906
        %v908 = vadd.f32 %v907, -0.4999988
        %v909 = vmul.f32 %v904, %v908
        %v910 = vadd.f32 1.0, %v909
        %v911 = vmul.f32 %v902, %v902
        %v912 = vmul.f32 %v911, -0.00019511016
        %v913 = vadd.f32 %v912, 0.008332121
        %v914 = vmul.f32 %v911, %v913
        %v915 = vadd.f32 %v914, -0.16666654
        %v916 = vmul.f32 %v911, %v915
        %v917 = vadd.f32 %v916, 1.0
        %v918 = vmul.f32 %v917, %v902
        %vm919 = vweird.f32 %v273
        %v920 = vadd.s32 %v903, 3
        %v921 = vand.u32 %v920, 3
        %vm922 = vcmp.lt.s32.totalorder %v921, 2
        %vm923 = vcmp.eq.s32.totalorder %v921, 0
        %v924 = vxor.u32 %v918, 2147483648
        %v925 = vsel %vm923, %v910, %v924
        %vm926 = vcmp.eq.s32.totalorder %v921, 2
        %v927 = vxor.u32 %v910, 2147483648
        %v928 = vsel %vm926, %v927, %v918
        %v929 = vsel %vm922, %v925, %v928
        %v930 = vsel %vm919, nan, %v929
        %v931 = vand.u32 2147483647, %v276
        %vm932 = vcmp.le.f32.partialorder %v931, 0.7853982
        %vm933 = vcmp.lt.s32.totalorder %v276, 0
        %v934 = vand.u32 %v276, 2139095040
        %v935 = vshrl.u32 %v934, 23
        %v936 = vsub.s32 %v935, 127
        %v937 = vand.u32 2147483647, %v276
        %v938 = vand.u32 %v937, 8388607
        %v939 = vor.u32 %v938, 8388608
        %v940 = vsub.s32 0, %v939
        %v941 = vadd.s32 %v936, 1
        %vm942 = vcmp.gt.s32.totalorder %v941, 0
        %v943 = vsel %vm942, %v941, 0
        %v944 = vshrl.u32 %v943, 5
        %v945 = vand.u32 %v943, 31
        %v946 = vsub.s32 32, %v945
        %v947 = vshrl.u32 683565275, %v946
        %v948 = vshll.u32 683565275, %v945
        %v949 = vshrl.u32 2475754826, %v946
        %v950 = vor.u32 %v948, %v949
        %v951 = vshll.u32 2475754826, %v945
        %v952 = vshrl.u32 2131351028, %v946
        %v953 = vor.u32 %v951, %v952
        %v954 = vshll.u32 2131351028, %v945
        %v955 = vshrl.u32 2102212464, %v946
        %v956 = vor.u32 %v954, %v955
        %v957 = vshll.u32 2102212464, %v945
        %v958 = vshrl.u32 920167782, %v946
        %v959 = vor.u32 %v957, %v958
        %v960 = vshll.u32 920167782, %v945
        %v961 = vshrl.u32 1326507024, %v946
        %v962 = vor.u32 %v960, %v961
        %vm963 = vcmp.lt.s32.totalorder %v944, 1
        %vm964 = vcmp.lt.s32.totalorder %v944, 2
        %vm965 = vcmp.lt.s32.totalorder %v944, 3
        %vm966 = vcmp.lt.s32.totalorder %v944, 4
        %v967 = vsel %vm963, %v947, %v950
        %v968 = vsel %vm966, %v956, 2102212464
        %v969 = vsel %vm965, %v953, %v968
        %v970 = vsel %vm964, %v967, %v969
        %v971 = vsel %vm963, %v950, %v953
        %v972 = vsel %vm966, %v959, 920167782
        %v973 = vsel %vm965, %v956, %v972
        %v974 = vsel %vm964, %v971, %v973
        %v975 = vsel %vm963, %v953, %v956
        %v976 = vsel %vm966, %v962, 1326507024
        %v977 = vsel %vm965, %v959, %v976
        %v978 = vsel %vm964, %v975, %v977
        %v979 = vshll.u32 %v939, 8
        %v980 = vand.u32 %v979, 65535
        %v981 = vshrl.u32 %v979, 16
        %v982 = vand.u32 %v978, 65535
        %v983 = vshrl.u32 %v978, 16
        %v984 = vmul.u32 %v980, %v982
        %v985 = vmul.u32 %v980, %v983
        %v986 = vmul.u32 %v981, %v982
        %v987 = vmul.u32 %v981, %v983
        %v988 = vshll.u32 %v985, 16
        %v989 = vshrl.u32 %v985, 16
        %v990 = vshll.u32 %v986, 16
        %v991 = vshrl.u32 %v986, 16
        %vm992 = vc.u32 %v984, %v988
        %v993 = vsel %vm992, 1, 0
        %v994 = vadd.s32 %v984, %v988
        %v995 = vadd.s32 %v987, %v993
        %vm996 = vc.u32 %v994, %v990
        %v997 = vsel %vm996, 1, 0
        %v998 = vadd.s32 %v994, %v990
        %v999 = vadd.s32 %v995, %v997
        %v1000 = vadd.s32 %v999, %v989
        %v1001 = vadd.s32 %v1000, %v991
        %v1002 = vand.u32 %v979, 65535
        %v1003 = vshrl.u32 %v979, 16
        %v1004 = vand.u32 %v974, 65535
        %v1005 = vshrl.u32 %v974, 16
        %v1006 = vmul.u32 %v1002, %v1004
        %v1007 = vmul.u32 %v1002, %v1005
        %v1008 = vmul.u32 %v1003, %v1004
        %v1009 = vmul.u32 %v1003, %v1005
        %v1010 = vshll.u32 %v1007, 16
        %v1011 = vshrl.u32 %v1007, 16
        %v1012 = vshll.u32 %v1008, 16
        %v1013 = vshrl.u32 %v1008, 16
        %vm1014 = vc.u32 %v1006, %v1010
        %v1015 = vsel %vm1014, 1, 0
        %v1016 = vadd.s32 %v1006, %v1010
        %v1017 = vadd.s32 %v1009, %v1015
        %vm1018 = vc.u32 %v1016, %v1012
        %v1019 = vsel %vm1018, 1, 0
        %v1020 = vadd.s32 %v1016, %v1012
        %v1021 = vadd.s32 %v1017, %v1019
        %v1022 = vadd.s32 %v1021, %v1011
        %v1023 = vadd.s32 %v1022, %v1013
        %v1024 = vmul.u32 %v979, %v970
        %v1025 = vadd.s32 %v1001, %v1020
        %vm1026 = vc.u32 %v1001, %v1020
        %v1027 = vadd.s32 %v1023, 1
        %v1028 = vsel %vm1026, %v1027, %v1023
        %v1029 = vadd.s32 %v1024, %v1028
        %v1030 = vadd.s32 %v1029, 536870912
        %v1031 = vshrl.u32 %v1030, 30
        %v1032 = vshll.u32 %v1031, 30
        %v1033 = vsub.s32 %v1029, %v1032
        %vm1034 = vcmp.lt.s32.totalorder %v1033, 0
        %v1035 = vsub.s32 0, %v1033
        %v1036 = vsel %vm1034, %v1035, %v1033
        %v1037 = vclz %v1036
        %v1038 = vsub.s32 %v1037, 2
        %vm1039 = vcmp.gt.s32.totalorder 0, %v1038
        %v1040 = vsel %vm1039, 0, %v1038
        %v1041 = vsub.s32 32, %v1040
        %v1042 = vshll.u32 %v1033, %v1040
        %v1043 = vshrl.u32 %v1025, %v1041
        %v1044 = vor.u32 %v1042, %v1043
        %v1045 = vsub.s32 4294967266, %v1040
        %v1046 = vadd.s32 %v1045, 127
        %v1047 = vshll.u32 %v1046, 23
        %v1048 = vor.u32 4788187, %v1047
        %v1049 = vand.u32 2147483647, %v1048
        %v1051 = vcvt.s32.f32 %v1044
        %v1052 = vmul.f32 %v1051, %v1049
        %v1053 = vxor.u32 %v1052, 2147483648
        %v1054 = vsel %vm933, %v1053, %v1052
        %v1055 = vsub.s32 4, %v1031
        %v1056 = vsel %vm933, %v1055, %v1031
        %v1057 = vsel %vm932, %v276, %v1054
        %v1058 = vsel %vm932, 0, %v1056
        %v1059 = vmul.f32 %v1057, %v1057
        %v1060 = vmul.f32 %v1059, -0.001358992
        %v1061 = vadd.f32 %v1060, 0.041655596
        %v1062 = vmul.f32 %v1059, %v1061
        %v1063 = vadd.f32 %v1062, -0.4999988
        %v1064 = vmul.f32 %v1059, %v1063
        %v1065 = vadd.f32 1.0, %v1064
        %v1066 = vmul.f32 %v1057, %v1057
        %v1067 = vmul.f32 %v1066, -0.00019511016
        %v1068 = vadd.f32 %v1067, 0.008332121
        %v1069 = vmul.f32 %v1066, %v1068
        %v1070 = vadd.f32 %v1069, -0.16666654
        %v1071 = vmul.f32 %v1066, %v1070
        %v1072 = vadd.f32 %v1071, 1.0
        %v1073 = vmul.f32 %v1072, %v1057
        %vm1074 = vweird.f32 %v276
        %v1075 = vadd.s32 %v1058, 3
        %v1076 = vand.u32 %v1075, 3
        %vm1077 = vcmp.lt.s32.totalorder %v1076, 2
        %vm1078 = vcmp.eq.s32.totalorder %v1076, 0
        %v1079 = vxor.u32 %v1073, 2147483648
        %v1080 = vsel %vm1078, %v1065, %v1079
        %vm1081 = vcmp.eq.s32.totalorder %v1076, 2
        %v1082 = vxor.u32 %v1065, 2147483648
        %v1083 = vsel %vm1081, %v1082, %v1073
        %v1084 = vsel %vm1077, %v1080, %v1083
        %v1085 = vsel %vm1074, nan, %v1084
        %v1086 = vand.u32 2147483647, %v279
        %vm1087 = vcmp.le.f32.partialorder %v1086, 0.7853982
        %vm1088 = vcmp.lt.s32.totalorder %v279, 0
        %v1089 = vand.u32 %v279, 2139095040
        %v1090 = vshrl.u32 %v1089, 23
        %v1091 = vsub.s32 %v1090, 127
        %v1092 = vand.u32 2147483647, %v279
        %v1093 = vand.u32 %v1092, 8388607
        %v1094 = vor.u32 %v1093, 8388608
        %v1095 = vsub.s32 0, %v1094
        %v1096 = vadd.s32 %v1091, 1
        %vm1097 = vcmp.gt.s32.totalorder %v1096, 0
        %v1098 = vsel %vm1097, %v1096, 0
        %v1099 = vshrl.u32 %v1098, 5
        %v1100 = vand.u32 %v1098, 31
        %v1101 = vsub.s32 32, %v1100
        %v1102 = vshrl.u32 683565275, %v1101
        %v1103 = vshll.u32 683565275, %v1100
        %v1104 = vshrl.u32 2475754826, %v1101
        %v1105 = vor.u32 %v1103, %v1104
        %v1106 = vshll.u32 2475754826, %v1100
        %v1107 = vshrl.u32 2131351028, %v1101
        %v1108 = vor.u32 %v1106, %v1107
        %v1109 = vshll.u32 2131351028, %v1100
        %v1110 = vshrl.u32 2102212464, %v1101
        %v1111 = vor.u32 %v1109, %v1110
        %v1112 = vshll.u32 2102212464, %v1100
        %v1113 = vshrl.u32 920167782, %v1101
        %v1114 = vor.u32 %v1112, %v1113
        %v1115 = vshll.u32 920167782, %v1100
        %v1116 = vshrl.u32 1326507024, %v1101
        %v1117 = vor.u32 %v1115, %v1116
        %vm1118 = vcmp.lt.s32.totalorder %v1099, 1
        %vm1119 = vcmp.lt.s32.totalorder %v1099, 2
        %vm1120 = vcmp.lt.s32.totalorder %v1099, 3
        %vm1121 = vcmp.lt.s32.totalorder %v1099, 4
        %v1122 = vsel %vm1118, %v1102, %v1105
        %v1123 = vsel %vm1121, %v1111, 2102212464
        %v1124 = vsel %vm1120, %v1108, %v1123
        %v1125 = vsel %vm1119, %v1122, %v1124
        %v1126 = vsel %vm1118, %v1105, %v1108
        %v1127 = vsel %vm1121, %v1114, 920167782
        %v1128 = vsel %vm1120, %v1111, %v1127
        %v1129 = vsel %vm1119, %v1126, %v1128
        %v1130 = vsel %vm1118, %v1108, %v1111
        %v1131 = vsel %vm1121, %v1117, 1326507024
        %v1132 = vsel %vm1120, %v1114, %v1131
        %v1133 = vsel %vm1119, %v1130, %v1132
        %v1134 = vshll.u32 %v1094, 8
        %v1135 = vand.u32 %v1134, 65535
        %v1136 = vshrl.u32 %v1134, 16
        %v1137 = vand.u32 %v1133, 65535
        %v1138 = vshrl.u32 %v1133, 16
        %v1139 = vmul.u32 %v1135, %v1137
        %v1140 = vmul.u32 %v1135, %v1138
        %v1141 = vmul.u32 %v1136, %v1137
        %v1142 = vmul.u32 %v1136, %v1138
        %v1143 = vshll.u32 %v1140, 16
        %v1144 = vshrl.u32 %v1140, 16
        %v1145 = vshll.u32 %v1141, 16
        %v1146 = vshrl.u32 %v1141, 16
        %vm1147 = vc.u32 %v1139, %v1143
        %v1148 = vsel %vm1147, 1, 0
        %v1149 = vadd.s32 %v1139, %v1143
        %v1150 = vadd.s32 %v1142, %v1148
        %vm1151 = vc.u32 %v1149, %v1145
        %v1152 = vsel %vm1151, 1, 0
        %v1153 = vadd.s32 %v1149, %v1145
        %v1154 = vadd.s32 %v1150, %v1152
        %v1155 = vadd.s32 %v1154, %v1144
        %v1156 = vadd.s32 %v1155, %v1146
        %v1157 = vand.u32 %v1134, 65535
        %v1158 = vshrl.u32 %v1134, 16
        %v1159 = vand.u32 %v1129, 65535
        %v1160 = vshrl.u32 %v1129, 16
        %v1161 = vmul.u32 %v1157, %v1159
        %v1162 = vmul.u32 %v1157, %v1160
        %v1163 = vmul.u32 %v1158, %v1159
        %v1164 = vmul.u32 %v1158, %v1160
        %v1165 = vshll.u32 %v1162, 16
        %v1166 = vshrl.u32 %v1162, 16
        %v1167 = vshll.u32 %v1163, 16
        %v1168 = vshrl.u32 %v1163, 16
        %vm1169 = vc.u32 %v1161, %v1165
        %v1170 = vsel %vm1169, 1, 0
        %v1171 = vadd.s32 %v1161, %v1165
        %v1172 = vadd.s32 %v1164, %v1170
        %vm1173 = vc.u32 %v1171, %v1167
        %v1174 = vsel %vm1173, 1, 0
        %v1175 = vadd.s32 %v1171, %v1167
        %v1176 = vadd.s32 %v1172, %v1174
        %v1177 = vadd.s32 %v1176, %v1166
        %v1178 = vadd.s32 %v1177, %v1168
        %v1179 = vmul.u32 %v1134, %v1125
        %v1180 = vadd.s32 %v1156, %v1175
        %vm1181 = vc.u32 %v1156, %v1175
        %v1182 = vadd.s32 %v1178, 1
        %v1183 = vsel %vm1181, %v1182, %v1178
        %v1184 = vadd.s32 %v1179, %v1183
        %v1185 = vadd.s32 %v1184, 536870912
        %v1186 = vshrl.u32 %v1185, 30
        %v1187 = vshll.u32 %v1186, 30
        %v1188 = vsub.s32 %v1184, %v1187
        %vm1189 = vcmp.lt.s32.totalorder %v1188, 0
        %v1190 = vsub.s32 0, %v1188
        %v1191 = vsel %vm1189, %v1190, %v1188
        %v1192 = vclz %v1191
        %v1193 = vsub.s32 %v1192, 2
        %vm1194 = vcmp.gt.s32.totalorder 0, %v1193
        %v1195 = vsel %vm1194, 0, %v1193
        %v1196 = vsub.s32 32, %v1195
        %v1197 = vshll.u32 %v1188, %v1195
        %v1198 = vshrl.u32 %v1180, %v1196
        %v1199 = vor.u32 %v1197, %v1198
        %v1200 = vsub.s32 4294967266, %v1195
        %v1201 = vadd.s32 %v1200, 127
        %v1202 = vshll.u32 %v1201, 23
        %v1203 = vor.u32 4788187, %v1202
        %v1204 = vand.u32 2147483647, %v1203
        %v1206 = vcvt.s32.f32 %v1199
        %v1207 = vmul.f32 %v1206, %v1204
        %v1208 = vxor.u32 %v1207, 2147483648
        %v1209 = vsel %vm1088, %v1208, %v1207
        %v1210 = vsub.s32 4, %v1186
        %v1211 = vsel %vm1088, %v1210, %v1186
        %v1212 = vsel %vm1087, %v279, %v1209
        %v1213 = vsel %vm1087, 0, %v1211
        %v1214 = vmul.f32 %v1212, %v1212
        %v1215 = vmul.f32 %v1214, -0.001358992
        %v1216 = vadd.f32 %v1215, 0.041655596
        %v1217 = vmul.f32 %v1214, %v1216
        %v1218 = vadd.f32 %v1217, -0.4999988
        %v1219 = vmul.f32 %v1214, %v1218
        %v1220 = vadd.f32 1.0, %v1219
        %v1221 = vmul.f32 %v1212, %v1212
        %v1222 = vmul.f32 %v1221, -0.00019511016
        %v1223 = vadd.f32 %v1222, 0.008332121
        %v1224 = vmul.f32 %v1221, %v1223
        %v1225 = vadd.f32 %v1224, -0.16666654
        %v1226 = vmul.f32 %v1221, %v1225
        %v1227 = vadd.f32 %v1226, 1.0
        %v1228 = vmul.f32 %v1227, %v1212
        %vm1229 = vweird.f32 %v279
        %v1230 = vadd.s32 %v1213, 3
        %v1231 = vand.u32 %v1230, 3
        %vm1232 = vcmp.lt.s32.totalorder %v1231, 2
        %vm1233 = vcmp.eq.s32.totalorder %v1231, 0
        %v1234 = vxor.u32 %v1228, 2147483648
        %v1235 = vsel %vm1233, %v1220, %v1234
        %vm1236 = vcmp.eq.s32.totalorder %v1231, 2
        %v1237 = vxor.u32 %v1220, 2147483648
        %v1238 = vsel %vm1236, %v1237, %v1228
        %v1239 = vsel %vm1232, %v1235, %v1238
        %v1240 = vsel %vm1229, nan, %v1239
        %v1241 = vand.u32 2147483647, %v282
        %vm1242 = vcmp.le.f32.partialorder %v1241, 0.7853982
        %vm1243 = vcmp.lt.s32.totalorder %v282, 0
        %v1244 = vand.u32 %v282, 2139095040
        %v1245 = vshrl.u32 %v1244, 23
        %v1246 = vsub.s32 %v1245, 127
        %v1247 = vand.u32 2147483647, %v282
        %v1248 = vand.u32 %v1247, 8388607
        %v1249 = vor.u32 %v1248, 8388608
        %v1250 = vsub.s32 0, %v1249
        %v1251 = vadd.s32 %v1246, 1
        %vm1252 = vcmp.gt.s32.totalorder %v1251, 0
        %v1253 = vsel %vm1252, %v1251, 0
        %v1254 = vshrl.u32 %v1253, 5
        %v1255 = vand.u32 %v1253, 31
        %v1256 = vsub.s32 32, %v1255
        %v1257 = vshrl.u32 683565275, %v1256
        %v1258 = vshll.u32 683565275, %v1255
        %v1259 = vshrl.u32 2475754826, %v1256
        %v1260 = vor.u32 %v1258, %v1259
        %v1261 = vshll.u32 2475754826, %v1255
        %v1262 = vshrl.u32 2131351028, %v1256
        %v1263 = vor.u32 %v1261, %v1262
        %v1264 = vshll.u32 2131351028, %v1255
        %v1265 = vshrl.u32 2102212464, %v1256
        %v1266 = vor.u32 %v1264, %v1265
        %v1267 = vshll.u32 2102212464, %v1255
        %v1268 = vshrl.u32 920167782, %v1256
        %v1269 = vor.u32 %v1267, %v1268
        %v1270 = vshll.u32 920167782, %v1255
        %v1271 = vshrl.u32 1326507024, %v1256
        %v1272 = vor.u32 %v1270, %v1271
        %vm1273 = vcmp.lt.s32.totalorder %v1254, 1
        %vm1274 = vcmp.lt.s32.totalorder %v1254, 2
        %vm1275 = vcmp.lt.s32.totalorder %v1254, 3
        %vm1276 = vcmp.lt.s32.totalorder %v1254, 4
        %v1277 = vsel %vm1273, %v1257, %v1260
        %v1278 = vsel %vm1276, %v1266, 2102212464
        %v1279 = vsel %vm1275, %v1263, %v1278
        %v1280 = vsel %vm1274, %v1277, %v1279
        %v1281 = vsel %vm1273, %v1260, %v1263
        %v1282 = vsel %vm1276, %v1269, 920167782
        %v1283 = vsel %vm1275, %v1266, %v1282
        %v1284 = vsel %vm1274, %v1281, %v1283
        %v1285 = vsel %vm1273, %v1263, %v1266
        %v1286 = vsel %vm1276, %v1272, 1326507024
        %v1287 = vsel %vm1275, %v1269, %v1286
        %v1288 = vsel %vm1274, %v1285, %v1287
        %v1289 = vshll.u32 %v1249, 8
        %v1290 = vand.u32 %v1289, 65535
        %v1291 = vshrl.u32 %v1289, 16
        %v1292 = vand.u32 %v1288, 65535
        %v1293 = vshrl.u32 %v1288, 16
        %v1294 = vmul.u32 %v1290, %v1292
        %v1295 = vmul.u32 %v1290, %v1293
        %v1296 = vmul.u32 %v1291, %v1292
        %v1297 = vmul.u32 %v1291, %v1293
        %v1298 = vshll.u32 %v1295, 16
        %v1299 = vshrl.u32 %v1295, 16
        %v1300 = vshll.u32 %v1296, 16
        %v1301 = vshrl.u32 %v1296, 16
        %vm1302 = vc.u32 %v1294, %v1298
        %v1303 = vsel %vm1302, 1, 0
        %v1304 = vadd.s32 %v1294, %v1298
        %v1305 = vadd.s32 %v1297, %v1303
        %vm1306 = vc.u32 %v1304, %v1300
        %v1307 = vsel %vm1306, 1, 0
        %v1308 = vadd.s32 %v1304, %v1300
        %v1309 = vadd.s32 %v1305, %v1307
        %v1310 = vadd.s32 %v1309, %v1299
        %v1311 = vadd.s32 %v1310, %v1301
        %v1312 = vand.u32 %v1289, 65535
        %v1313 = vshrl.u32 %v1289, 16
        %v1314 = vand.u32 %v1284, 65535
        %v1315 = vshrl.u32 %v1284, 16
        %v1316 = vmul.u32 %v1312, %v1314
        %v1317 = vmul.u32 %v1312, %v1315
        %v1318 = vmul.u32 %v1313, %v1314
        %v1319 = vmul.u32 %v1313, %v1315
        %v1320 = vshll.u32 %v1317, 16
        %v1321 = vshrl.u32 %v1317, 16
        %v1322 = vshll.u32 %v1318, 16
        %v1323 = vshrl.u32 %v1318, 16
        %vm1324 = vc.u32 %v1316, %v1320
        %v1325 = vsel %vm1324, 1, 0
        %v1326 = vadd.s32 %v1316, %v1320
        %v1327 = vadd.s32 %v1319, %v1325
        %vm1328 = vc.u32 %v1326, %v1322
        %v1329 = vsel %vm1328, 1, 0
        %v1330 = vadd.s32 %v1326, %v1322
        %v1331 = vadd.s32 %v1327, %v1329
        %v1332 = vadd.s32 %v1331, %v1321
        %v1333 = vadd.s32 %v1332, %v1323
        %v1334 = vmul.u32 %v1289, %v1280
        %v1335 = vadd.s32 %v1311, %v1330
        %vm1336 = vc.u32 %v1311, %v1330
        %v1337 = vadd.s32 %v1333, 1
        %v1338 = vsel %vm1336, %v1337, %v1333
        %v1339 = vadd.s32 %v1334, %v1338
        %v1340 = vadd.s32 %v1339, 536870912
        %v1341 = vshrl.u32 %v1340, 30
        %v1342 = vshll.u32 %v1341, 30
        %v1343 = vsub.s32 %v1339, %v1342
        %vm1344 = vcmp.lt.s32.totalorder %v1343, 0
        %v1345 = vsub.s32 0, %v1343
        %v1346 = vsel %vm1344, %v1345, %v1343
        %v1347 = vclz %v1346
        %v1348 = vsub.s32 %v1347, 2
        %vm1349 = vcmp.gt.s32.totalorder 0, %v1348
        %v1350 = vsel %vm1349, 0, %v1348
        %v1351 = vsub.s32 32, %v1350
        %v1352 = vshll.u32 %v1343, %v1350
        %v1353 = vshrl.u32 %v1335, %v1351
        %v1354 = vor.u32 %v1352, %v1353
        %v1355 = vsub.s32 4294967266, %v1350
        %v1356 = vadd.s32 %v1355, 127
        %v1357 = vshll.u32 %v1356, 23
        %v1358 = vor.u32 4788187, %v1357
        %v1359 = vand.u32 2147483647, %v1358
        %v1361 = vcvt.s32.f32 %v1354
        %v1362 = vmul.f32 %v1361, %v1359
        %v1363 = vxor.u32 %v1362, 2147483648
        %v1364 = vsel %vm1243, %v1363, %v1362
        %v1365 = vsub.s32 4, %v1341
        %v1366 = vsel %vm1243, %v1365, %v1341
        %v1367 = vsel %vm1242, %v282, %v1364
        %v1368 = vsel %vm1242, 0, %v1366
        %v1369 = vmul.f32 %v1367, %v1367
        %v1370 = vmul.f32 %v1369, -0.001358992
        %v1371 = vadd.f32 %v1370, 0.041655596
        %v1372 = vmul.f32 %v1369, %v1371
        %v1373 = vadd.f32 %v1372, -0.4999988
        %v1374 = vmul.f32 %v1369, %v1373
        %v1375 = vadd.f32 1.0, %v1374
        %v1376 = vmul.f32 %v1367, %v1367
        %v1377 = vmul.f32 %v1376, -0.00019511016
        %v1378 = vadd.f32 %v1377, 0.008332121
        %v1379 = vmul.f32 %v1376, %v1378
        %v1380 = vadd.f32 %v1379, -0.16666654
        %v1381 = vmul.f32 %v1376, %v1380
        %v1382 = vadd.f32 %v1381, 1.0
        %v1383 = vmul.f32 %v1382, %v1367
        %vm1384 = vweird.f32 %v282
        %v1385 = vadd.s32 %v1368, 3
        %v1386 = vand.u32 %v1385, 3
        %vm1387 = vcmp.lt.s32.totalorder %v1386, 2
        %vm1388 = vcmp.eq.s32.totalorder %v1386, 0
        %v1389 = vxor.u32 %v1383, 2147483648
        %v1390 = vsel %vm1388, %v1375, %v1389
        %vm1391 = vcmp.eq.s32.totalorder %v1386, 2
        %v1392 = vxor.u32 %v1375, 2147483648
        %v1393 = vsel %vm1391, %v1392, %v1383
        %v1394 = vsel %vm1387, %v1390, %v1393
        %v1395 = vsel %vm1384, nan, %v1394
        %v1396 = vand.u32 2147483647, %v285
        %vm1397 = vcmp.le.f32.partialorder %v1396, 0.7853982
        %vm1398 = vcmp.lt.s32.totalorder %v285, 0
        %v1399 = vand.u32 %v285, 2139095040
        %v1400 = vshrl.u32 %v1399, 23
        %v1401 = vsub.s32 %v1400, 127
        %v1402 = vand.u32 2147483647, %v285
        %v1403 = vand.u32 %v1402, 8388607
        %v1404 = vor.u32 %v1403, 8388608
        %v1405 = vsub.s32 0, %v1404
        %v1406 = vadd.s32 %v1401, 1
        %vm1407 = vcmp.gt.s32.totalorder %v1406, 0
        %v1408 = vsel %vm1407, %v1406, 0
        %v1409 = vshrl.u32 %v1408, 5
        %v1410 = vand.u32 %v1408, 31
        %v1411 = vsub.s32 32, %v1410
        %v1412 = vshrl.u32 683565275, %v1411
        %v1413 = vshll.u32 683565275, %v1410
        %v1414 = vshrl.u32 2475754826, %v1411
        %v1415 = vor.u32 %v1413, %v1414
        %v1416 = vshll.u32 2475754826, %v1410
        %v1417 = vshrl.u32 2131351028, %v1411
        %v1418 = vor.u32 %v1416, %v1417
        %v1419 = vshll.u32 2131351028, %v1410
        %v1420 = vshrl.u32 2102212464, %v1411
        %v1421 = vor.u32 %v1419, %v1420
        %v1422 = vshll.u32 2102212464, %v1410
        %v1423 = vshrl.u32 920167782, %v1411
        %v1424 = vor.u32 %v1422, %v1423
        %v1425 = vshll.u32 920167782, %v1410
        %v1426 = vshrl.u32 1326507024, %v1411
        %v1427 = vor.u32 %v1425, %v1426
        %vm1428 = vcmp.lt.s32.totalorder %v1409, 1
        %vm1429 = vcmp.lt.s32.totalorder %v1409, 2
        %vm1430 = vcmp.lt.s32.totalorder %v1409, 3
        %vm1431 = vcmp.lt.s32.totalorder %v1409, 4
        %v1432 = vsel %vm1428, %v1412, %v1415
        %v1433 = vsel %vm1431, %v1421, 2102212464
        %v1434 = vsel %vm1430, %v1418, %v1433
        %v1435 = vsel %vm1429, %v1432, %v1434
        %v1436 = vsel %vm1428, %v1415, %v1418
        %v1437 = vsel %vm1431, %v1424, 920167782
        %v1438 = vsel %vm1430, %v1421, %v1437
        %v1439 = vsel %vm1429, %v1436, %v1438
        %v1440 = vsel %vm1428, %v1418, %v1421
        %v1441 = vsel %vm1431, %v1427, 1326507024
        %v1442 = vsel %vm1430, %v1424, %v1441
        %v1443 = vsel %vm1429, %v1440, %v1442
        %v1444 = vshll.u32 %v1404, 8
        %v1445 = vand.u32 %v1444, 65535
        %v1446 = vshrl.u32 %v1444, 16
        %v1447 = vand.u32 %v1443, 65535
        %v1448 = vshrl.u32 %v1443, 16
        %v1449 = vmul.u32 %v1445, %v1447
        %v1450 = vmul.u32 %v1445, %v1448
        %v1451 = vmul.u32 %v1446, %v1447
        %v1452 = vmul.u32 %v1446, %v1448
        %v1453 = vshll.u32 %v1450, 16
        %v1454 = vshrl.u32 %v1450, 16
        %v1455 = vshll.u32 %v1451, 16
        %v1456 = vshrl.u32 %v1451, 16
        %vm1457 = vc.u32 %v1449, %v1453
        %v1458 = vsel %vm1457, 1, 0
        %v1459 = vadd.s32 %v1449, %v1453
        %v1460 = vadd.s32 %v1452, %v1458
        %vm1461 = vc.u32 %v1459, %v1455
        %v1462 = vsel %vm1461, 1, 0
        %v1463 = vadd.s32 %v1459, %v1455
        %v1464 = vadd.s32 %v1460, %v1462
        %v1465 = vadd.s32 %v1464, %v1454
        %v1466 = vadd.s32 %v1465, %v1456
        %v1467 = vand.u32 %v1444, 65535
        %v1468 = vshrl.u32 %v1444, 16
        %v1469 = vand.u32 %v1439, 65535
        %v1470 = vshrl.u32 %v1439, 16
        %v1471 = vmul.u32 %v1467, %v1469
        %v1472 = vmul.u32 %v1467, %v1470
        %v1473 = vmul.u32 %v1468, %v1469
        %v1474 = vmul.u32 %v1468, %v1470
        %v1475 = vshll.u32 %v1472, 16
        %v1476 = vshrl.u32 %v1472, 16
        %v1477 = vshll.u32 %v1473, 16
        %v1478 = vshrl.u32 %v1473, 16
        %vm1479 = vc.u32 %v1471, %v1475
        %v1480 = vsel %vm1479, 1, 0
        %v1481 = vadd.s32 %v1471, %v1475
        %v1482 = vadd.s32 %v1474, %v1480
        %vm1483 = vc.u32 %v1481, %v1477
        %v1484 = vsel %vm1483, 1, 0
        %v1485 = vadd.s32 %v1481, %v1477
        %v1486 = vadd.s32 %v1482, %v1484
        %v1487 = vadd.s32 %v1486, %v1476
        %v1488 = vadd.s32 %v1487, %v1478
        %v1489 = vmul.u32 %v1444, %v1435
        %v1490 = vadd.s32 %v1466, %v1485
        %vm1491 = vc.u32 %v1466, %v1485
        %v1492 = vadd.s32 %v1488, 1
        %v1493 = vsel %vm1491, %v1492, %v1488
        %v1494 = vadd.s32 %v1489, %v1493
        %v1495 = vadd.s32 %v1494, 536870912
        %v1496 = vshrl.u32 %v1495, 30
        %v1497 = vshll.u32 %v1496, 30
        %v1498 = vsub.s32 %v1494, %v1497
        %vm1499 = vcmp.lt.s32.totalorder %v1498, 0
        %v1500 = vsub.s32 0, %v1498
        %v1501 = vsel %vm1499, %v1500, %v1498
        %v1502 = vclz %v1501
        %v1503 = vsub.s32 %v1502, 2
        %vm1504 = vcmp.gt.s32.totalorder 0, %v1503
        %v1505 = vsel %vm1504, 0, %v1503
        %v1506 = vsub.s32 32, %v1505
        %v1507 = vshll.u32 %v1498, %v1505
        %v1508 = vshrl.u32 %v1490, %v1506
        %v1509 = vor.u32 %v1507, %v1508
        %v1510 = vsub.s32 4294967266, %v1505
        %v1511 = vadd.s32 %v1510, 127
        %v1512 = vshll.u32 %v1511, 23
        %v1513 = vor.u32 4788187, %v1512
        %v1514 = vand.u32 2147483647, %v1513
        %v1516 = vcvt.s32.f32 %v1509
        %v1517 = vmul.f32 %v1516, %v1514
        %v1518 = vxor.u32 %v1517, 2147483648
        %v1519 = vsel %vm1398, %v1518, %v1517
        %v1520 = vsub.s32 4, %v1496
        %v1521 = vsel %vm1398, %v1520, %v1496
        %v1522 = vsel %vm1397, %v285, %v1519
        %v1523 = vsel %vm1397, 0, %v1521
        %v1524 = vmul.f32 %v1522, %v1522
        %v1525 = vmul.f32 %v1524, -0.001358992
        %v1526 = vadd.f32 %v1525, 0.041655596
        %v1527 = vmul.f32 %v1524, %v1526
        %v1528 = vadd.f32 %v1527, -0.4999988
        %v1529 = vmul.f32 %v1524, %v1528
        %v1530 = vadd.f32 1.0, %v1529
        %v1531 = vmul.f32 %v1522, %v1522
        %v1532 = vmul.f32 %v1531, -0.00019511016
        %v1533 = vadd.f32 %v1532, 0.008332121
        %v1534 = vmul.f32 %v1531, %v1533
        %v1535 = vadd.f32 %v1534, -0.16666654
        %v1536 = vmul.f32 %v1531, %v1535
        %v1537 = vadd.f32 %v1536, 1.0
        %v1538 = vmul.f32 %v1537, %v1522
        %vm1539 = vweird.f32 %v285
        %v1540 = vadd.s32 %v1523, 3
        %v1541 = vand.u32 %v1540, 3
        %vm1542 = vcmp.lt.s32.totalorder %v1541, 2
        %vm1543 = vcmp.eq.s32.totalorder %v1541, 0
        %v1544 = vxor.u32 %v1538, 2147483648
        %v1545 = vsel %vm1543, %v1530, %v1544
        %vm1546 = vcmp.eq.s32.totalorder %v1541, 2
        %v1547 = vxor.u32 %v1530, 2147483648
        %v1548 = vsel %vm1546, %v1547, %v1538
        %v1549 = vsel %vm1542, %v1545, %v1548
        %v1550 = vsel %vm1539, nan, %v1549
        %v1551 = vand.u32 2147483647, %v288
        %vm1552 = vcmp.le.f32.partialorder %v1551, 0.7853982
        %vm1553 = vcmp.lt.s32.totalorder %v288, 0
        %v1554 = vand.u32 %v288, 2139095040
        %v1555 = vshrl.u32 %v1554, 23
        %v1556 = vsub.s32 %v1555, 127
        %v1557 = vand.u32 2147483647, %v288
        %v1558 = vand.u32 %v1557, 8388607
        %v1559 = vor.u32 %v1558, 8388608
        %v1560 = vsub.s32 0, %v1559
        %v1561 = vadd.s32 %v1556, 1
        %vm1562 = vcmp.gt.s32.totalorder %v1561, 0
        %v1563 = vsel %vm1562, %v1561, 0
        %v1564 = vshrl.u32 %v1563, 5
        %v1565 = vand.u32 %v1563, 31
        %v1566 = vsub.s32 32, %v1565
        %v1567 = vshrl.u32 683565275, %v1566
        %v1568 = vshll.u32 683565275, %v1565
        %v1569 = vshrl.u32 2475754826, %v1566
        %v1570 = vor.u32 %v1568, %v1569
        %v1571 = vshll.u32 2475754826, %v1565
        %v1572 = vshrl.u32 2131351028, %v1566
        %v1573 = vor.u32 %v1571, %v1572
        %v1574 = vshll.u32 2131351028, %v1565
        %v1575 = vshrl.u32 2102212464, %v1566
        %v1576 = vor.u32 %v1574, %v1575
        %v1577 = vshll.u32 2102212464, %v1565
        %v1578 = vshrl.u32 920167782, %v1566
        %v1579 = vor.u32 %v1577, %v1578
        %v1580 = vshll.u32 920167782, %v1565
        %v1581 = vshrl.u32 1326507024, %v1566
        %v1582 = vor.u32 %v1580, %v1581
        %vm1583 = vcmp.lt.s32.totalorder %v1564, 1
        %vm1584 = vcmp.lt.s32.totalorder %v1564, 2
        %vm1585 = vcmp.lt.s32.totalorder %v1564, 3
        %vm1586 = vcmp.lt.s32.totalorder %v1564, 4
        %v1587 = vsel %vm1583, %v1567, %v1570
        %v1588 = vsel %vm1586, %v1576, 2102212464
        %v1589 = vsel %vm1585, %v1573, %v1588
        %v1590 = vsel %vm1584, %v1587, %v1589
        %v1591 = vsel %vm1583, %v1570, %v1573
        %v1592 = vsel %vm1586, %v1579, 920167782
        %v1593 = vsel %vm1585, %v1576, %v1592
        %v1594 = vsel %vm1584, %v1591, %v1593
        %v1595 = vsel %vm1583, %v1573, %v1576
        %v1596 = vsel %vm1586, %v1582, 1326507024
        %v1597 = vsel %vm1585, %v1579, %v1596
        %v1598 = vsel %vm1584, %v1595, %v1597
        %v1599 = vshll.u32 %v1559, 8
        %v1600 = vand.u32 %v1599, 65535
        %v1601 = vshrl.u32 %v1599, 16
        %v1602 = vand.u32 %v1598, 65535
        %v1603 = vshrl.u32 %v1598, 16
        %v1604 = vmul.u32 %v1600, %v1602
        %v1605 = vmul.u32 %v1600, %v1603
        %v1606 = vmul.u32 %v1601, %v1602
        %v1607 = vmul.u32 %v1601, %v1603
        %v1608 = vshll.u32 %v1605, 16
        %v1609 = vshrl.u32 %v1605, 16
        %v1610 = vshll.u32 %v1606, 16
        %v1611 = vshrl.u32 %v1606, 16
        %vm1612 = vc.u32 %v1604, %v1608
        %v1613 = vsel %vm1612, 1, 0
        %v1614 = vadd.s32 %v1604, %v1608
        %v1615 = vadd.s32 %v1607, %v1613
        %vm1616 = vc.u32 %v1614, %v1610
        %v1617 = vsel %vm1616, 1, 0
        %v1618 = vadd.s32 %v1614, %v1610
        %v1619 = vadd.s32 %v1615, %v1617
        %v1620 = vadd.s32 %v1619, %v1609
        %v1621 = vadd.s32 %v1620, %v1611
        %v1622 = vand.u32 %v1599, 65535
        %v1623 = vshrl.u32 %v1599, 16
        %v1624 = vand.u32 %v1594, 65535
        %v1625 = vshrl.u32 %v1594, 16
        %v1626 = vmul.u32 %v1622, %v1624
        %v1627 = vmul.u32 %v1622, %v1625
        %v1628 = vmul.u32 %v1623, %v1624
        %v1629 = vmul.u32 %v1623, %v1625
        %v1630 = vshll.u32 %v1627, 16
        %v1631 = vshrl.u32 %v1627, 16
        %v1632 = vshll.u32 %v1628, 16
        %v1633 = vshrl.u32 %v1628, 16
        %vm1634 = vc.u32 %v1626, %v1630
        %v1635 = vsel %vm1634, 1, 0
        %v1636 = vadd.s32 %v1626, %v1630
        %v1637 = vadd.s32 %v1629, %v1635
        %vm1638 = vc.u32 %v1636, %v1632
        %v1639 = vsel %vm1638, 1, 0
        %v1640 = vadd.s32 %v1636, %v1632
        %v1641 = vadd.s32 %v1637, %v1639
        %v1642 = vadd.s32 %v1641, %v1631
        %v1643 = vadd.s32 %v1642, %v1633
        %v1644 = vmul.u32 %v1599, %v1590
        %v1645 = vadd.s32 %v1621, %v1640
        %vm1646 = vc.u32 %v1621, %v1640
        %v1647 = vadd.s32 %v1643, 1
        %v1648 = vsel %vm1646, %v1647, %v1643
        %v1649 = vadd.s32 %v1644, %v1648
        %v1650 = vadd.s32 %v1649, 536870912
        %v1651 = vshrl.u32 %v1650, 30
        %v1652 = vshll.u32 %v1651, 30
        %v1653 = vsub.s32 %v1649, %v1652
        %vm1654 = vcmp.lt.s32.totalorder %v1653, 0
        %v1655 = vsub.s32 0, %v1653
        %v1656 = vsel %vm1654, %v1655, %v1653
        %v1657 = vclz %v1656
        %v1658 = vsub.s32 %v1657, 2
        %vm1659 = vcmp.gt.s32.totalorder 0, %v1658
        %v1660 = vsel %vm1659, 0, %v1658
        %v1661 = vsub.s32 32, %v1660
        %v1662 = vshll.u32 %v1653, %v1660
        %v1663 = vshrl.u32 %v1645, %v1661
        %v1664 = vor.u32 %v1662, %v1663
        %v1665 = vsub.s32 4294967266, %v1660
        %v1666 = vadd.s32 %v1665, 127
        %v1667 = vshll.u32 %v1666, 23
        %v1668 = vor.u32 4788187, %v1667
        %v1669 = vand.u32 2147483647, %v1668
        %v1671 = vcvt.s32.f32 %v1664
        %v1672 = vmul.f32 %v1671, %v1669
        %v1673 = vxor.u32 %v1672, 2147483648
        %v1674 = vsel %vm1553, %v1673, %v1672
        %v1675 = vsub.s32 4, %v1651
        %v1676 = vsel %vm1553, %v1675, %v1651
        %v1677 = vsel %vm1552, %v288, %v1674
        %v1678 = vsel %vm1552, 0, %v1676
        %v1679 = vmul.f32 %v1677, %v1677
        %v1680 = vmul.f32 %v1679, -0.001358992
        %v1681 = vadd.f32 %v1680, 0.041655596
        %v1682 = vmul.f32 %v1679, %v1681
        %v1683 = vadd.f32 %v1682, -0.4999988
        %v1684 = vmul.f32 %v1679, %v1683
        %v1685 = vadd.f32 1.0, %v1684
        %v1686 = vmul.f32 %v1677, %v1677
        %v1687 = vmul.f32 %v1686, -0.00019511016
        %v1688 = vadd.f32 %v1687, 0.008332121
        %v1689 = vmul.f32 %v1686, %v1688
        %v1690 = vadd.f32 %v1689, -0.16666654
        %v1691 = vmul.f32 %v1686, %v1690
        %v1692 = vadd.f32 %v1691, 1.0
        %v1693 = vmul.f32 %v1692, %v1677
        %vm1694 = vweird.f32 %v288
        %v1695 = vadd.s32 %v1678, 3
        %v1696 = vand.u32 %v1695, 3
        %vm1697 = vcmp.lt.s32.totalorder %v1696, 2
        %vm1698 = vcmp.eq.s32.totalorder %v1696, 0
        %v1699 = vxor.u32 %v1693, 2147483648
        %v1700 = vsel %vm1698, %v1685, %v1699
        %vm1701 = vcmp.eq.s32.totalorder %v1696, 2
        %v1702 = vxor.u32 %v1685, 2147483648
        %v1703 = vsel %vm1701, %v1702, %v1693
        %v1704 = vsel %vm1697, %v1700, %v1703
        %v1705 = vsel %vm1694, nan, %v1704
        %v1706 = vand.u32 2147483647, %v291
        %vm1707 = vcmp.le.f32.partialorder %v1706, 0.7853982
        %vm1708 = vcmp.lt.s32.totalorder %v291, 0
        %v1709 = vand.u32 %v291, 2139095040
        %v1710 = vshrl.u32 %v1709, 23
        %v1711 = vsub.s32 %v1710, 127
        %v1712 = vand.u32 2147483647, %v291
        %v1713 = vand.u32 %v1712, 8388607
        %v1714 = vor.u32 %v1713, 8388608
        %v1715 = vsub.s32 0, %v1714
        %v1716 = vadd.s32 %v1711, 1
        %vm1717 = vcmp.gt.s32.totalorder %v1716, 0
        %v1718 = vsel %vm1717, %v1716, 0
        %v1719 = vshrl.u32 %v1718, 5
        %v1720 = vand.u32 %v1718, 31
        %v1721 = vsub.s32 32, %v1720
        %v1722 = vshrl.u32 683565275, %v1721
        %v1723 = vshll.u32 683565275, %v1720
        %v1724 = vshrl.u32 2475754826, %v1721
        %v1725 = vor.u32 %v1723, %v1724
        %v1726 = vshll.u32 2475754826, %v1720
        %v1727 = vshrl.u32 2131351028, %v1721
        %v1728 = vor.u32 %v1726, %v1727
        %v1729 = vshll.u32 2131351028, %v1720
        %v1730 = vshrl.u32 2102212464, %v1721
        %v1731 = vor.u32 %v1729, %v1730
        %v1732 = vshll.u32 2102212464, %v1720
        %v1733 = vshrl.u32 920167782, %v1721
        %v1734 = vor.u32 %v1732, %v1733
        %v1735 = vshll.u32 920167782, %v1720
        %v1736 = vshrl.u32 1326507024, %v1721
        %v1737 = vor.u32 %v1735, %v1736
        %vm1738 = vcmp.lt.s32.totalorder %v1719, 1
        %vm1739 = vcmp.lt.s32.totalorder %v1719, 2
        %vm1740 = vcmp.lt.s32.totalorder %v1719, 3
        %vm1741 = vcmp.lt.s32.totalorder %v1719, 4
        %v1742 = vsel %vm1738, %v1722, %v1725
        %v1743 = vsel %vm1741, %v1731, 2102212464
        %v1744 = vsel %vm1740, %v1728, %v1743
        %v1745 = vsel %vm1739, %v1742, %v1744
        %v1746 = vsel %vm1738, %v1725, %v1728
        %v1747 = vsel %vm1741, %v1734, 920167782
        %v1748 = vsel %vm1740, %v1731, %v1747
        %v1749 = vsel %vm1739, %v1746, %v1748
        %v1750 = vsel %vm1738, %v1728, %v1731
        %v1751 = vsel %vm1741, %v1737, 1326507024
        %v1752 = vsel %vm1740, %v1734, %v1751
        %v1753 = vsel %vm1739, %v1750, %v1752
        %v1754 = vshll.u32 %v1714, 8
        %v1755 = vand.u32 %v1754, 65535
        %v1756 = vshrl.u32 %v1754, 16
        %v1757 = vand.u32 %v1753, 65535
        %v1758 = vshrl.u32 %v1753, 16
        %v1759 = vmul.u32 %v1755, %v1757
        %v1760 = vmul.u32 %v1755, %v1758
        %v1761 = vmul.u32 %v1756, %v1757
        %v1762 = vmul.u32 %v1756, %v1758
        %v1763 = vshll.u32 %v1760, 16
        %v1764 = vshrl.u32 %v1760, 16
        %v1765 = vshll.u32 %v1761, 16
        %v1766 = vshrl.u32 %v1761, 16
        %vm1767 = vc.u32 %v1759, %v1763
        %v1768 = vsel %vm1767, 1, 0
        %v1769 = vadd.s32 %v1759, %v1763
        %v1770 = vadd.s32 %v1762, %v1768
        %vm1771 = vc.u32 %v1769, %v1765
        %v1772 = vsel %vm1771, 1, 0
        %v1773 = vadd.s32 %v1769, %v1765
        %v1774 = vadd.s32 %v1770, %v1772
        %v1775 = vadd.s32 %v1774, %v1764
        %v1776 = vadd.s32 %v1775, %v1766
        %v1777 = vand.u32 %v1754, 65535
        %v1778 = vshrl.u32 %v1754, 16
        %v1779 = vand.u32 %v1749, 65535
        %v1780 = vshrl.u32 %v1749, 16
        %v1781 = vmul.u32 %v1777, %v1779
        %v1782 = vmul.u32 %v1777, %v1780
        %v1783 = vmul.u32 %v1778, %v1779
        %v1784 = vmul.u32 %v1778, %v1780
        %v1785 = vshll.u32 %v1782, 16
        %v1786 = vshrl.u32 %v1782, 16
        %v1787 = vshll.u32 %v1783, 16
        %v1788 = vshrl.u32 %v1783, 16
        %vm1789 = vc.u32 %v1781, %v1785
        %v1790 = vsel %vm1789, 1, 0
        %v1791 = vadd.s32 %v1781, %v1785
        %v1792 = vadd.s32 %v1784, %v1790
        %vm1793 = vc.u32 %v1791, %v1787
        %v1794 = vsel %vm1793, 1, 0
        %v1795 = vadd.s32 %v1791, %v1787
        %v1796 = vadd.s32 %v1792, %v1794
        %v1797 = vadd.s32 %v1796, %v1786
        %v1798 = vadd.s32 %v1797, %v1788
        %v1799 = vmul.u32 %v1754, %v1745
        %v1800 = vadd.s32 %v1776, %v1795
        %vm1801 = vc.u32 %v1776, %v1795
        %v1802 = vadd.s32 %v1798, 1
        %v1803 = vsel %vm1801, %v1802, %v1798
        %v1804 = vadd.s32 %v1799, %v1803
        %v1805 = vadd.s32 %v1804, 536870912
        %v1806 = vshrl.u32 %v1805, 30
        %v1807 = vshll.u32 %v1806, 30
        %v1808 = vsub.s32 %v1804, %v1807
        %vm1809 = vcmp.lt.s32.totalorder %v1808, 0
        %v1810 = vsub.s32 0, %v1808
        %v1811 = vsel %vm1809, %v1810, %v1808
        %v1812 = vclz %v1811
        %v1813 = vsub.s32 %v1812, 2
        %vm1814 = vcmp.gt.s32.totalorder 0, %v1813
        %v1815 = vsel %vm1814, 0, %v1813
        %v1816 = vsub.s32 32, %v1815
        %v1817 = vshll.u32 %v1808, %v1815
        %v1818 = vshrl.u32 %v1800, %v1816
        %v1819 = vor.u32 %v1817, %v1818
        %v1820 = vsub.s32 4294967266, %v1815
        %v1821 = vadd.s32 %v1820, 127
        %v1822 = vshll.u32 %v1821, 23
        %v1823 = vor.u32 4788187, %v1822
        %v1824 = vand.u32 2147483647, %v1823
        %v1826 = vcvt.s32.f32 %v1819
        %v1827 = vmul.f32 %v1826, %v1824
        %v1828 = vxor.u32 %v1827, 2147483648
        %v1829 = vsel %vm1708, %v1828, %v1827
        %v1830 = vsub.s32 4, %v1806
        %v1831 = vsel %vm1708, %v1830, %v1806
        %v1832 = vsel %vm1707, %v291, %v1829
        %v1833 = vsel %vm1707, 0, %v1831
        %v1834 = vmul.f32 %v1832, %v1832
        %v1835 = vmul.f32 %v1834, -0.001358992
        %v1836 = vadd.f32 %v1835, 0.041655596
        %v1837 = vmul.f32 %v1834, %v1836
        %v1838 = vadd.f32 %v1837, -0.4999988
        %v1839 = vmul.f32 %v1834, %v1838
        %v1840 = vadd.f32 1.0, %v1839
        %v1841 = vmul.f32 %v1832, %v1832
        %v1842 = vmul.f32 %v1841, -0.00019511016
        %v1843 = vadd.f32 %v1842, 0.008332121
        %v1844 = vmul.f32 %v1841, %v1843
        %v1845 = vadd.f32 %v1844, -0.16666654
        %v1846 = vmul.f32 %v1841, %v1845
        %v1847 = vadd.f32 %v1846, 1.0
        %v1848 = vmul.f32 %v1847, %v1832
        %vm1849 = vweird.f32 %v291
        %v1850 = vadd.s32 %v1833, 3
        %v1851 = vand.u32 %v1850, 3
        %vm1852 = vcmp.lt.s32.totalorder %v1851, 2
        %vm1853 = vcmp.eq.s32.totalorder %v1851, 0
        %v1854 = vxor.u32 %v1848, 2147483648
        %v1855 = vsel %vm1853, %v1840, %v1854
        %vm1856 = vcmp.eq.s32.totalorder %v1851, 2
        %v1857 = vxor.u32 %v1840, 2147483648
        %v1858 = vsel %vm1856, %v1857, %v1848
        %v1859 = vsel %vm1852, %v1855, %v1858
        %v1860 = vsel %vm1849, nan, %v1859
        %v1861 = vand.u32 2147483647, %v294
        %vm1862 = vcmp.le.f32.partialorder %v1861, 0.7853982
        %vm1863 = vcmp.lt.s32.totalorder %v294, 0
        %v1864 = vand.u32 %v294, 2139095040
        %v1865 = vshrl.u32 %v1864, 23
        %v1866 = vsub.s32 %v1865, 127
        %v1867 = vand.u32 2147483647, %v294
        %v1868 = vand.u32 %v1867, 8388607
        %v1869 = vor.u32 %v1868, 8388608
        %v1870 = vsub.s32 0, %v1869
        %v1871 = vadd.s32 %v1866, 1
        %vm1872 = vcmp.gt.s32.totalorder %v1871, 0
        %v1873 = vsel %vm1872, %v1871, 0
        %v1874 = vshrl.u32 %v1873, 5
        %v1875 = vand.u32 %v1873, 31
        %v1876 = vsub.s32 32, %v1875
        %v1877 = vshrl.u32 683565275, %v1876
        %v1878 = vshll.u32 683565275, %v1875
        %v1879 = vshrl.u32 2475754826, %v1876
        %v1880 = vor.u32 %v1878, %v1879
        %v1881 = vshll.u32 2475754826, %v1875
        %v1882 = vshrl.u32 2131351028, %v1876
        %v1883 = vor.u32 %v1881, %v1882
        %v1884 = vshll.u32 2131351028, %v1875
        %v1885 = vshrl.u32 2102212464, %v1876
        %v1886 = vor.u32 %v1884, %v1885
        %v1887 = vshll.u32 2102212464, %v1875
        %v1888 = vshrl.u32 920167782, %v1876
        %v1889 = vor.u32 %v1887, %v1888
        %v1890 = vshll.u32 920167782, %v1875
        %v1891 = vshrl.u32 1326507024, %v1876
        %v1892 = vor.u32 %v1890, %v1891
        %vm1893 = vcmp.lt.s32.totalorder %v1874, 1
        %vm1894 = vcmp.lt.s32.totalorder %v1874, 2
        %vm1895 = vcmp.lt.s32.totalorder %v1874, 3
        %vm1896 = vcmp.lt.s32.totalorder %v1874, 4
        %v1897 = vsel %vm1893, %v1877, %v1880
        %v1898 = vsel %vm1896, %v1886, 2102212464
        %v1899 = vsel %vm1895, %v1883, %v1898
        %v1900 = vsel %vm1894, %v1897, %v1899
        %v1901 = vsel %vm1893, %v1880, %v1883
        %v1902 = vsel %vm1896, %v1889, 920167782
        %v1903 = vsel %vm1895, %v1886, %v1902
        %v1904 = vsel %vm1894, %v1901, %v1903
        %v1905 = vsel %vm1893, %v1883, %v1886
        %v1906 = vsel %vm1896, %v1892, 1326507024
        %v1907 = vsel %vm1895, %v1889, %v1906
        %v1908 = vsel %vm1894, %v1905, %v1907
        %v1909 = vshll.u32 %v1869, 8
        %v1910 = vand.u32 %v1909, 65535
        %v1911 = vshrl.u32 %v1909, 16
        %v1912 = vand.u32 %v1908, 65535
        %v1913 = vshrl.u32 %v1908, 16
        %v1914 = vmul.u32 %v1910, %v1912
        %v1915 = vmul.u32 %v1910, %v1913
        %v1916 = vmul.u32 %v1911, %v1912
        %v1917 = vmul.u32 %v1911, %v1913
        %v1918 = vshll.u32 %v1915, 16
        %v1919 = vshrl.u32 %v1915, 16
        %v1920 = vshll.u32 %v1916, 16
        %v1921 = vshrl.u32 %v1916, 16
        %vm1922 = vc.u32 %v1914, %v1918
        %v1923 = vsel %vm1922, 1, 0
        %v1924 = vadd.s32 %v1914, %v1918
        %v1925 = vadd.s32 %v1917, %v1923
        %vm1926 = vc.u32 %v1924, %v1920
        %v1927 = vsel %vm1926, 1, 0
        %v1928 = vadd.s32 %v1924, %v1920
        %v1929 = vadd.s32 %v1925, %v1927
        %v1930 = vadd.s32 %v1929, %v1919
        %v1931 = vadd.s32 %v1930, %v1921
        %v1932 = vand.u32 %v1909, 65535
        %v1933 = vshrl.u32 %v1909, 16
        %v1934 = vand.u32 %v1904, 65535
        %v1935 = vshrl.u32 %v1904, 16
        %v1936 = vmul.u32 %v1932, %v1934
        %v1937 = vmul.u32 %v1932, %v1935
        %v1938 = vmul.u32 %v1933, %v1934
        %v1939 = vmul.u32 %v1933, %v1935
        %v1940 = vshll.u32 %v1937, 16
        %v1941 = vshrl.u32 %v1937, 16
        %v1942 = vshll.u32 %v1938, 16
        %v1943 = vshrl.u32 %v1938, 16
        %vm1944 = vc.u32 %v1936, %v1940
        %v1945 = vsel %vm1944, 1, 0
        %v1946 = vadd.s32 %v1936, %v1940
        %v1947 = vadd.s32 %v1939, %v1945
        %vm1948 = vc.u32 %v1946, %v1942
        %v1949 = vsel %vm1948, 1, 0
        %v1950 = vadd.s32 %v1946, %v1942
        %v1951 = vadd.s32 %v1947, %v1949
        %v1952 = vadd.s32 %v1951, %v1941
        %v1953 = vadd.s32 %v1952, %v1943
        %v1954 = vmul.u32 %v1909, %v1900
        %v1955 = vadd.s32 %v1931, %v1950
        %vm1956 = vc.u32 %v1931, %v1950
        %v1957 = vadd.s32 %v1953, 1
        %v1958 = vsel %vm1956, %v1957, %v1953
        %v1959 = vadd.s32 %v1954, %v1958
        %v1960 = vadd.s32 %v1959, 536870912
        %v1961 = vshrl.u32 %v1960, 30
        %v1962 = vshll.u32 %v1961, 30
        %v1963 = vsub.s32 %v1959, %v1962
        %vm1964 = vcmp.lt.s32.totalorder %v1963, 0
        %v1965 = vsub.s32 0, %v1963
        %v1966 = vsel %vm1964, %v1965, %v1963
        %v1967 = vclz %v1966
        %v1968 = vsub.s32 %v1967, 2
        %vm1969 = vcmp.gt.s32.totalorder 0, %v1968
        %v1970 = vsel %vm1969, 0, %v1968
        %v1971 = vsub.s32 32, %v1970
        %v1972 = vshll.u32 %v1963, %v1970
        %v1973 = vshrl.u32 %v1955, %v1971
        %v1974 = vor.u32 %v1972, %v1973
        %v1975 = vsub.s32 4294967266, %v1970
        %v1976 = vadd.s32 %v1975, 127
        %v1977 = vshll.u32 %v1976, 23
        %v1978 = vor.u32 4788187, %v1977
        %v1979 = vand.u32 2147483647, %v1978
        %v1981 = vcvt.s32.f32 %v1974
        %v1982 = vmul.f32 %v1981, %v1979
        %v1983 = vxor.u32 %v1982, 2147483648
        %v1984 = vsel %vm1863, %v1983, %v1982
        %v1985 = vsub.s32 4, %v1961
        %v1986 = vsel %vm1863, %v1985, %v1961
        %v1987 = vsel %vm1862, %v294, %v1984
        %v1988 = vsel %vm1862, 0, %v1986
        %v1989 = vmul.f32 %v1987, %v1987
        %v1990 = vmul.f32 %v1989, -0.001358992
        %v1991 = vadd.f32 %v1990, 0.041655596
        %v1992 = vmul.f32 %v1989, %v1991
        %v1993 = vadd.f32 %v1992, -0.4999988
        %v1994 = vmul.f32 %v1989, %v1993
        %v1995 = vadd.f32 1.0, %v1994
        %v1996 = vmul.f32 %v1987, %v1987
        %v1997 = vmul.f32 %v1996, -0.00019511016
        %v1998 = vadd.f32 %v1997, 0.008332121
        %v1999 = vmul.f32 %v1996, %v1998
        %v2000 = vadd.f32 %v1999, -0.16666654
        %v2001 = vmul.f32 %v1996, %v2000
        %v2002 = vadd.f32 %v2001, 1.0
        %v2003 = vmul.f32 %v2002, %v1987
        %vm2004 = vweird.f32 %v294
        %v2005 = vadd.s32 %v1988, 3
        %v2006 = vand.u32 %v2005, 3
        %vm2007 = vcmp.lt.s32.totalorder %v2006, 2
        %vm2008 = vcmp.eq.s32.totalorder %v2006, 0
        %v2009 = vxor.u32 %v2003, 2147483648
        %v2010 = vsel %vm2008, %v1995, %v2009
        %vm2011 = vcmp.eq.s32.totalorder %v2006, 2
        %v2012 = vxor.u32 %v1995, 2147483648
        %v2013 = vsel %vm2011, %v2012, %v2003
        %v2014 = vsel %vm2007, %v2010, %v2013
        %v2015 = vsel %vm2004, nan, %v2014
        %v2016 = vand.u32 2147483647, %v297
        %vm2017 = vcmp.le.f32.partialorder %v2016, 0.7853982
        %vm2018 = vcmp.lt.s32.totalorder %v297, 0
        %v2019 = vand.u32 %v297, 2139095040
        %v2020 = vshrl.u32 %v2019, 23
        %v2021 = vsub.s32 %v2020, 127
        %v2022 = vand.u32 2147483647, %v297
        %v2023 = vand.u32 %v2022, 8388607
        %v2024 = vor.u32 %v2023, 8388608
        %v2025 = vsub.s32 0, %v2024
        %v2026 = vadd.s32 %v2021, 1
        %vm2027 = vcmp.gt.s32.totalorder %v2026, 0
        %v2028 = vsel %vm2027, %v2026, 0
        %v2029 = vshrl.u32 %v2028, 5
        %v2030 = vand.u32 %v2028, 31
        %v2031 = vsub.s32 32, %v2030
        %v2032 = vshrl.u32 683565275, %v2031
        %v2033 = vshll.u32 683565275, %v2030
        %v2034 = vshrl.u32 2475754826, %v2031
        %v2035 = vor.u32 %v2033, %v2034
        %v2036 = vshll.u32 2475754826, %v2030
        %v2037 = vshrl.u32 2131351028, %v2031
        %v2038 = vor.u32 %v2036, %v2037
        %v2039 = vshll.u32 2131351028, %v2030
        %v2040 = vshrl.u32 2102212464, %v2031
        %v2041 = vor.u32 %v2039, %v2040
        %v2042 = vshll.u32 2102212464, %v2030
        %v2043 = vshrl.u32 920167782, %v2031
        %v2044 = vor.u32 %v2042, %v2043
        %v2045 = vshll.u32 920167782, %v2030
        %v2046 = vshrl.u32 1326507024, %v2031
        %v2047 = vor.u32 %v2045, %v2046
        %vm2048 = vcmp.lt.s32.totalorder %v2029, 1
        %vm2049 = vcmp.lt.s32.totalorder %v2029, 2
        %vm2050 = vcmp.lt.s32.totalorder %v2029, 3
        %vm2051 = vcmp.lt.s32.totalorder %v2029, 4
        %v2052 = vsel %vm2048, %v2032, %v2035
        %v2053 = vsel %vm2051, %v2041, 2102212464
        %v2054 = vsel %vm2050, %v2038, %v2053
        %v2055 = vsel %vm2049, %v2052, %v2054
        %v2056 = vsel %vm2048, %v2035, %v2038
        %v2057 = vsel %vm2051, %v2044, 920167782
        %v2058 = vsel %vm2050, %v2041, %v2057
        %v2059 = vsel %vm2049, %v2056, %v2058
        %v2060 = vsel %vm2048, %v2038, %v2041
        %v2061 = vsel %vm2051, %v2047, 1326507024
        %v2062 = vsel %vm2050, %v2044, %v2061
        %v2063 = vsel %vm2049, %v2060, %v2062
        %v2064 = vshll.u32 %v2024, 8
        %v2065 = vand.u32 %v2064, 65535
        %v2066 = vshrl.u32 %v2064, 16
        %v2067 = vand.u32 %v2063, 65535
        %v2068 = vshrl.u32 %v2063, 16
        %v2069 = vmul.u32 %v2065, %v2067
        %v2070 = vmul.u32 %v2065, %v2068
        %v2071 = vmul.u32 %v2066, %v2067
        %v2072 = vmul.u32 %v2066, %v2068
        %v2073 = vshll.u32 %v2070, 16
        %v2074 = vshrl.u32 %v2070, 16
        %v2075 = vshll.u32 %v2071, 16
        %v2076 = vshrl.u32 %v2071, 16
        %vm2077 = vc.u32 %v2069, %v2073
        %v2078 = vsel %vm2077, 1, 0
        %v2079 = vadd.s32 %v2069, %v2073
        %v2080 = vadd.s32 %v2072, %v2078
        %vm2081 = vc.u32 %v2079, %v2075
        %v2082 = vsel %vm2081, 1, 0
        %v2083 = vadd.s32 %v2079, %v2075
        %v2084 = vadd.s32 %v2080, %v2082
        %v2085 = vadd.s32 %v2084, %v2074
        %v2086 = vadd.s32 %v2085, %v2076
        %v2087 = vand.u32 %v2064, 65535
        %v2088 = vshrl.u32 %v2064, 16
        %v2089 = vand.u32 %v2059, 65535
        %v2090 = vshrl.u32 %v2059, 16
        %v2091 = vmul.u32 %v2087, %v2089
        %v2092 = vmul.u32 %v2087, %v2090
        %v2093 = vmul.u32 %v2088, %v2089
        %v2094 = vmul.u32 %v2088, %v2090
        %v2095 = vshll.u32 %v2092, 16
        %v2096 = vshrl.u32 %v2092, 16
        %v2097 = vshll.u32 %v2093, 16
        %v2098 = vshrl.u32 %v2093, 16
        %vm2099 = vc.u32 %v2091, %v2095
        %v2100 = vsel %vm2099, 1, 0
        %v2101 = vadd.s32 %v2091, %v2095
        %v2102 = vadd.s32 %v2094, %v2100
        %vm2103 = vc.u32 %v2101, %v2097
        %v2104 = vsel %vm2103, 1, 0
        %v2105 = vadd.s32 %v2101, %v2097
        %v2106 = vadd.s32 %v2102, %v2104
        %v2107 = vadd.s32 %v2106, %v2096
        %v2108 = vadd.s32 %v2107, %v2098
        %v2109 = vmul.u32 %v2064, %v2055
        %v2110 = vadd.s32 %v2086, %v2105
        %vm2111 = vc.u32 %v2086, %v2105
        %v2112 = vadd.s32 %v2108, 1
        %v2113 = vsel %vm2111, %v2112, %v2108
        %v2114 = vadd.s32 %v2109, %v2113
        %v2115 = vadd.s32 %v2114, 536870912
        %v2116 = vshrl.u32 %v2115, 30
        %v2117 = vshll.u32 %v2116, 30
        %v2118 = vsub.s32 %v2114, %v2117
        %vm2119 = vcmp.lt.s32.totalorder %v2118, 0
        %v2120 = vsub.s32 0, %v2118
        %v2121 = vsel %vm2119, %v2120, %v2118
        %v2122 = vclz %v2121
        %v2123 = vsub.s32 %v2122, 2
        %vm2124 = vcmp.gt.s32.totalorder 0, %v2123
        %v2125 = vsel %vm2124, 0, %v2123
        %v2126 = vsub.s32 32, %v2125
        %v2127 = vshll.u32 %v2118, %v2125
        %v2128 = vshrl.u32 %v2110, %v2126
        %v2129 = vor.u32 %v2127, %v2128
        %v2130 = vsub.s32 4294967266, %v2125
        %v2131 = vadd.s32 %v2130, 127
        %v2132 = vshll.u32 %v2131, 23
        %v2133 = vor.u32 4788187, %v2132
        %v2134 = vand.u32 2147483647, %v2133
        %v2136 = vcvt.s32.f32 %v2129
        %v2137 = vmul.f32 %v2136, %v2134
        %v2138 = vxor.u32 %v2137, 2147483648
        %v2139 = vsel %vm2018, %v2138, %v2137
        %v2140 = vsub.s32 4, %v2116
        %v2141 = vsel %vm2018, %v2140, %v2116
        %v2142 = vsel %vm2017, %v297, %v2139
        %v2143 = vsel %vm2017, 0, %v2141
        %v2144 = vmul.f32 %v2142, %v2142
        %v2145 = vmul.f32 %v2144, -0.001358992
        %v2146 = vadd.f32 %v2145, 0.041655596
        %v2147 = vmul.f32 %v2144, %v2146
        %v2148 = vadd.f32 %v2147, -0.4999988
        %v2149 = vmul.f32 %v2144, %v2148
        %v2150 = vadd.f32 1.0, %v2149
        %v2151 = vmul.f32 %v2142, %v2142
        %v2152 = vmul.f32 %v2151, -0.00019511016
        %v2153 = vadd.f32 %v2152, 0.008332121
        %v2154 = vmul.f32 %v2151, %v2153
        %v2155 = vadd.f32 %v2154, -0.16666654
        %v2156 = vmul.f32 %v2151, %v2155
        %v2157 = vadd.f32 %v2156, 1.0
        %v2158 = vmul.f32 %v2157, %v2142
        %vm2159 = vweird.f32 %v297
        %v2160 = vadd.s32 %v2143, 3
        %v2161 = vand.u32 %v2160, 3
        %vm2162 = vcmp.lt.s32.totalorder %v2161, 2
        %vm2163 = vcmp.eq.s32.totalorder %v2161, 0
        %v2164 = vxor.u32 %v2158, 2147483648
        %v2165 = vsel %vm2163, %v2150, %v2164
        %vm2166 = vcmp.eq.s32.totalorder %v2161, 2
        %v2167 = vxor.u32 %v2150, 2147483648
        %v2168 = vsel %vm2166, %v2167, %v2158
        %v2169 = vsel %vm2162, %v2165, %v2168
        %v2170 = vsel %vm2159, nan, %v2169
        %v2171 = vand.u32 2147483647, %v300
        %vm2172 = vcmp.le.f32.partialorder %v2171, 0.7853982
        %vm2173 = vcmp.lt.s32.totalorder %v300, 0
        %v2174 = vand.u32 %v300, 2139095040
        %v2175 = vshrl.u32 %v2174, 23
        %v2176 = vsub.s32 %v2175, 127
        %v2177 = vand.u32 2147483647, %v300
        %v2178 = vand.u32 %v2177, 8388607
        %v2179 = vor.u32 %v2178, 8388608
        %v2180 = vsub.s32 0, %v2179
        %v2181 = vadd.s32 %v2176, 1
        %vm2182 = vcmp.gt.s32.totalorder %v2181, 0
        %v2183 = vsel %vm2182, %v2181, 0
        %v2184 = vshrl.u32 %v2183, 5
        %v2185 = vand.u32 %v2183, 31
        %v2186 = vsub.s32 32, %v2185
        %v2187 = vshrl.u32 683565275, %v2186
        %v2188 = vshll.u32 683565275, %v2185
        %v2189 = vshrl.u32 2475754826, %v2186
        %v2190 = vor.u32 %v2188, %v2189
        %v2191 = vshll.u32 2475754826, %v2185
        %v2192 = vshrl.u32 2131351028, %v2186
        %v2193 = vor.u32 %v2191, %v2192
        %v2194 = vshll.u32 2131351028, %v2185
        %v2195 = vshrl.u32 2102212464, %v2186
        %v2196 = vor.u32 %v2194, %v2195
        %v2197 = vshll.u32 2102212464, %v2185
        %v2198 = vshrl.u32 920167782, %v2186
        %v2199 = vor.u32 %v2197, %v2198
        %v2200 = vshll.u32 920167782, %v2185
        %v2201 = vshrl.u32 1326507024, %v2186
        %v2202 = vor.u32 %v2200, %v2201
        %vm2203 = vcmp.lt.s32.totalorder %v2184, 1
        %vm2204 = vcmp.lt.s32.totalorder %v2184, 2
        %vm2205 = vcmp.lt.s32.totalorder %v2184, 3
        %vm2206 = vcmp.lt.s32.totalorder %v2184, 4
        %v2207 = vsel %vm2203, %v2187, %v2190
        %v2208 = vsel %vm2206, %v2196, 2102212464
        %v2209 = vsel %vm2205, %v2193, %v2208
        %v2210 = vsel %vm2204, %v2207, %v2209
        %v2211 = vsel %vm2203, %v2190, %v2193
        %v2212 = vsel %vm2206, %v2199, 920167782
        %v2213 = vsel %vm2205, %v2196, %v2212
        %v2214 = vsel %vm2204, %v2211, %v2213
        %v2215 = vsel %vm2203, %v2193, %v2196
        %v2216 = vsel %vm2206, %v2202, 1326507024
        %v2217 = vsel %vm2205, %v2199, %v2216
        %v2218 = vsel %vm2204, %v2215, %v2217
        %v2219 = vshll.u32 %v2179, 8
        %v2220 = vand.u32 %v2219, 65535
        %v2221 = vshrl.u32 %v2219, 16
        %v2222 = vand.u32 %v2218, 65535
        %v2223 = vshrl.u32 %v2218, 16
        %v2224 = vmul.u32 %v2220, %v2222
        %v2225 = vmul.u32 %v2220, %v2223
        %v2226 = vmul.u32 %v2221, %v2222
        %v2227 = vmul.u32 %v2221, %v2223
        %v2228 = vshll.u32 %v2225, 16
        %v2229 = vshrl.u32 %v2225, 16
        %v2230 = vshll.u32 %v2226, 16
        %v2231 = vshrl.u32 %v2226, 16
        %vm2232 = vc.u32 %v2224, %v2228
        %v2233 = vsel %vm2232, 1, 0
        %v2234 = vadd.s32 %v2224, %v2228
        %v2235 = vadd.s32 %v2227, %v2233
        %vm2236 = vc.u32 %v2234, %v2230
        %v2237 = vsel %vm2236, 1, 0
        %v2238 = vadd.s32 %v2234, %v2230
        %v2239 = vadd.s32 %v2235, %v2237
        %v2240 = vadd.s32 %v2239, %v2229
        %v2241 = vadd.s32 %v2240, %v2231
        %v2242 = vand.u32 %v2219, 65535
        %v2243 = vshrl.u32 %v2219, 16
        %v2244 = vand.u32 %v2214, 65535
        %v2245 = vshrl.u32 %v2214, 16
        %v2246 = vmul.u32 %v2242, %v2244
        %v2247 = vmul.u32 %v2242, %v2245
        %v2248 = vmul.u32 %v2243, %v2244
        %v2249 = vmul.u32 %v2243, %v2245
        %v2250 = vshll.u32 %v2247, 16
        %v2251 = vshrl.u32 %v2247, 16
        %v2252 = vshll.u32 %v2248, 16
        %v2253 = vshrl.u32 %v2248, 16
        %vm2254 = vc.u32 %v2246, %v2250
        %v2255 = vsel %vm2254, 1, 0
        %v2256 = vadd.s32 %v2246, %v2250
        %v2257 = vadd.s32 %v2249, %v2255
        %vm2258 = vc.u32 %v2256, %v2252
        %v2259 = vsel %vm2258, 1, 0
        %v2260 = vadd.s32 %v2256, %v2252
        %v2261 = vadd.s32 %v2257, %v2259
        %v2262 = vadd.s32 %v2261, %v2251
        %v2263 = vadd.s32 %v2262, %v2253
        %v2264 = vmul.u32 %v2219, %v2210
        %v2265 = vadd.s32 %v2241, %v2260
        %vm2266 = vc.u32 %v2241, %v2260
        %v2267 = vadd.s32 %v2263, 1
        %v2268 = vsel %vm2266, %v2267, %v2263
        %v2269 = vadd.s32 %v2264, %v2268
        %v2270 = vadd.s32 %v2269, 536870912
        %v2271 = vshrl.u32 %v2270, 30
        %v2272 = vshll.u32 %v2271, 30
        %v2273 = vsub.s32 %v2269, %v2272
        %vm2274 = vcmp.lt.s32.totalorder %v2273, 0
        %v2275 = vsub.s32 0, %v2273
        %v2276 = vsel %vm2274, %v2275, %v2273
        %v2277 = vclz %v2276
        %v2278 = vsub.s32 %v2277, 2
        %vm2279 = vcmp.gt.s32.totalorder 0, %v2278
        %v2280 = vsel %vm2279, 0, %v2278
        %v2281 = vsub.s32 32, %v2280
        %v2282 = vshll.u32 %v2273, %v2280
        %v2283 = vshrl.u32 %v2265, %v2281
        %v2284 = vor.u32 %v2282, %v2283
        %v2285 = vsub.s32 4294967266, %v2280
        %v2286 = vadd.s32 %v2285, 127
        %v2287 = vshll.u32 %v2286, 23
        %v2288 = vor.u32 4788187, %v2287
        %v2289 = vand.u32 2147483647, %v2288
        %v2291 = vcvt.s32.f32 %v2284
        %v2292 = vmul.f32 %v2291, %v2289
        %v2293 = vxor.u32 %v2292, 2147483648
        %v2294 = vsel %vm2173, %v2293, %v2292
        %v2295 = vsub.s32 4, %v2271
        %v2296 = vsel %vm2173, %v2295, %v2271
        %v2297 = vsel %vm2172, %v300, %v2294
        %v2298 = vsel %vm2172, 0, %v2296
        %v2299 = vmul.f32 %v2297, %v2297
        %v2300 = vmul.f32 %v2299, -0.001358992
        %v2301 = vadd.f32 %v2300, 0.041655596
        %v2302 = vmul.f32 %v2299, %v2301
        %v2303 = vadd.f32 %v2302, -0.4999988
        %v2304 = vmul.f32 %v2299, %v2303
        %v2305 = vadd.f32 1.0, %v2304
        %v2306 = vmul.f32 %v2297, %v2297
        %v2307 = vmul.f32 %v2306, -0.00019511016
        %v2308 = vadd.f32 %v2307, 0.008332121
        %v2309 = vmul.f32 %v2306, %v2308
        %v2310 = vadd.f32 %v2309, -0.16666654
        %v2311 = vmul.f32 %v2306, %v2310
        %v2312 = vadd.f32 %v2311, 1.0
        %v2313 = vmul.f32 %v2312, %v2297
        %vm2314 = vweird.f32 %v300
        %v2315 = vadd.s32 %v2298, 3
        %v2316 = vand.u32 %v2315, 3
        %vm2317 = vcmp.lt.s32.totalorder %v2316, 2
        %vm2318 = vcmp.eq.s32.totalorder %v2316, 0
        %v2319 = vxor.u32 %v2313, 2147483648
        %v2320 = vsel %vm2318, %v2305, %v2319
        %vm2321 = vcmp.eq.s32.totalorder %v2316, 2
        %v2322 = vxor.u32 %v2305, 2147483648
        %v2323 = vsel %vm2321, %v2322, %v2313
        %v2324 = vsel %vm2317, %v2320, %v2323
        %v2325 = vsel %vm2314, nan, %v2324
        %v2326 = vand.u32 2147483647, %v303
        %vm2327 = vcmp.le.f32.partialorder %v2326, 0.7853982
        %vm2328 = vcmp.lt.s32.totalorder %v303, 0
        %v2329 = vand.u32 %v303, 2139095040
        %v2330 = vshrl.u32 %v2329, 23
        %v2331 = vsub.s32 %v2330, 127
        %v2332 = vand.u32 2147483647, %v303
        %v2333 = vand.u32 %v2332, 8388607
        %v2334 = vor.u32 %v2333, 8388608
        %v2335 = vsub.s32 0, %v2334
        %v2336 = vadd.s32 %v2331, 1
        %vm2337 = vcmp.gt.s32.totalorder %v2336, 0
        %v2338 = vsel %vm2337, %v2336, 0
        %v2339 = vshrl.u32 %v2338, 5
        %v2340 = vand.u32 %v2338, 31
        %v2341 = vsub.s32 32, %v2340
        %v2342 = vshrl.u32 683565275, %v2341
        %v2343 = vshll.u32 683565275, %v2340
        %v2344 = vshrl.u32 2475754826, %v2341
        %v2345 = vor.u32 %v2343, %v2344
        %v2346 = vshll.u32 2475754826, %v2340
        %v2347 = vshrl.u32 2131351028, %v2341
        %v2348 = vor.u32 %v2346, %v2347
        %v2349 = vshll.u32 2131351028, %v2340
        %v2350 = vshrl.u32 2102212464, %v2341
        %v2351 = vor.u32 %v2349, %v2350
        %v2352 = vshll.u32 2102212464, %v2340
        %v2353 = vshrl.u32 920167782, %v2341
        %v2354 = vor.u32 %v2352, %v2353
        %v2355 = vshll.u32 920167782, %v2340
        %v2356 = vshrl.u32 1326507024, %v2341
        %v2357 = vor.u32 %v2355, %v2356
        %vm2358 = vcmp.lt.s32.totalorder %v2339, 1
        %vm2359 = vcmp.lt.s32.totalorder %v2339, 2
        %vm2360 = vcmp.lt.s32.totalorder %v2339, 3
        %vm2361 = vcmp.lt.s32.totalorder %v2339, 4
        %v2362 = vsel %vm2358, %v2342, %v2345
        %v2363 = vsel %vm2361, %v2351, 2102212464
        %v2364 = vsel %vm2360, %v2348, %v2363
        %v2365 = vsel %vm2359, %v2362, %v2364
        %v2366 = vsel %vm2358, %v2345, %v2348
        %v2367 = vsel %vm2361, %v2354, 920167782
        %v2368 = vsel %vm2360, %v2351, %v2367
        %v2369 = vsel %vm2359, %v2366, %v2368
        %v2370 = vsel %vm2358, %v2348, %v2351
        %v2371 = vsel %vm2361, %v2357, 1326507024
        %v2372 = vsel %vm2360, %v2354, %v2371
        %v2373 = vsel %vm2359, %v2370, %v2372
        %v2374 = vshll.u32 %v2334, 8
        %v2375 = vand.u32 %v2374, 65535
        %v2376 = vshrl.u32 %v2374, 16
        %v2377 = vand.u32 %v2373, 65535
        %v2378 = vshrl.u32 %v2373, 16
        %v2379 = vmul.u32 %v2375, %v2377
        %v2380 = vmul.u32 %v2375, %v2378
        %v2381 = vmul.u32 %v2376, %v2377
        %v2382 = vmul.u32 %v2376, %v2378
        %v2383 = vshll.u32 %v2380, 16
        %v2384 = vshrl.u32 %v2380, 16
        %v2385 = vshll.u32 %v2381, 16
        %v2386 = vshrl.u32 %v2381, 16
        %vm2387 = vc.u32 %v2379, %v2383
        %v2388 = vsel %vm2387, 1, 0
        %v2389 = vadd.s32 %v2379, %v2383
        %v2390 = vadd.s32 %v2382, %v2388
        %vm2391 = vc.u32 %v2389, %v2385
        %v2392 = vsel %vm2391, 1, 0
        %v2393 = vadd.s32 %v2389, %v2385
        %v2394 = vadd.s32 %v2390, %v2392
        %v2395 = vadd.s32 %v2394, %v2384
        %v2396 = vadd.s32 %v2395, %v2386
        %v2397 = vand.u32 %v2374, 65535
        %v2398 = vshrl.u32 %v2374, 16
        %v2399 = vand.u32 %v2369, 65535
        %v2400 = vshrl.u32 %v2369, 16
        %v2401 = vmul.u32 %v2397, %v2399
        %v2402 = vmul.u32 %v2397, %v2400
        %v2403 = vmul.u32 %v2398, %v2399
        %v2404 = vmul.u32 %v2398, %v2400
        %v2405 = vshll.u32 %v2402, 16
        %v2406 = vshrl.u32 %v2402, 16
        %v2407 = vshll.u32 %v2403, 16
        %v2408 = vshrl.u32 %v2403, 16
        %vm2409 = vc.u32 %v2401, %v2405
        %v2410 = vsel %vm2409, 1, 0
        %v2411 = vadd.s32 %v2401, %v2405
        %v2412 = vadd.s32 %v2404, %v2410
        %vm2413 = vc.u32 %v2411, %v2407
        %v2414 = vsel %vm2413, 1, 0
        %v2415 = vadd.s32 %v2411, %v2407
        %v2416 = vadd.s32 %v2412, %v2414
        %v2417 = vadd.s32 %v2416, %v2406
        %v2418 = vadd.s32 %v2417, %v2408
        %v2419 = vmul.u32 %v2374, %v2365
        %v2420 = vadd.s32 %v2396, %v2415
        %vm2421 = vc.u32 %v2396, %v2415
        %v2422 = vadd.s32 %v2418, 1
        %v2423 = vsel %vm2421, %v2422, %v2418
        %v2424 = vadd.s32 %v2419, %v2423
        %v2425 = vadd.s32 %v2424, 536870912
        %v2426 = vshrl.u32 %v2425, 30
        %v2427 = vshll.u32 %v2426, 30
        %v2428 = vsub.s32 %v2424, %v2427
        %vm2429 = vcmp.lt.s32.totalorder %v2428, 0
        %v2430 = vsub.s32 0, %v2428
        %v2431 = vsel %vm2429, %v2430, %v2428
        %v2432 = vclz %v2431
        %v2433 = vsub.s32 %v2432, 2
        %vm2434 = vcmp.gt.s32.totalorder 0, %v2433
        %v2435 = vsel %vm2434, 0, %v2433
        %v2436 = vsub.s32 32, %v2435
        %v2437 = vshll.u32 %v2428, %v2435
        %v2438 = vshrl.u32 %v2420, %v2436
        %v2439 = vor.u32 %v2437, %v2438
        %v2440 = vsub.s32 4294967266, %v2435
        %v2441 = vadd.s32 %v2440, 127
        %v2442 = vshll.u32 %v2441, 23
        %v2443 = vor.u32 4788187, %v2442
        %v2444 = vand.u32 2147483647, %v2443
        %v2446 = vcvt.s32.f32 %v2439
        %v2447 = vmul.f32 %v2446, %v2444
        %v2448 = vxor.u32 %v2447, 2147483648
        %v2449 = vsel %vm2328, %v2448, %v2447
        %v2450 = vsub.s32 4, %v2426
        %v2451 = vsel %vm2328, %v2450, %v2426
        %v2452 = vsel %vm2327, %v303, %v2449
        %v2453 = vsel %vm2327, 0, %v2451
        %v2454 = vmul.f32 %v2452, %v2452
        %v2455 = vmul.f32 %v2454, -0.001358992
        %v2456 = vadd.f32 %v2455, 0.041655596
        %v2457 = vmul.f32 %v2454, %v2456
        %v2458 = vadd.f32 %v2457, -0.4999988
        %v2459 = vmul.f32 %v2454, %v2458
        %v2460 = vadd.f32 1.0, %v2459
        %v2461 = vmul.f32 %v2452, %v2452
        %v2462 = vmul.f32 %v2461, -0.00019511016
        %v2463 = vadd.f32 %v2462, 0.008332121
        %v2464 = vmul.f32 %v2461, %v2463
        %v2465 = vadd.f32 %v2464, -0.16666654
        %v2466 = vmul.f32 %v2461, %v2465
        %v2467 = vadd.f32 %v2466, 1.0
        %v2468 = vmul.f32 %v2467, %v2452
        %vm2469 = vweird.f32 %v303
        %v2470 = vadd.s32 %v2453, 3
        %v2471 = vand.u32 %v2470, 3
        %vm2472 = vcmp.lt.s32.totalorder %v2471, 2
        %vm2473 = vcmp.eq.s32.totalorder %v2471, 0
        %v2474 = vxor.u32 %v2468, 2147483648
        %v2475 = vsel %vm2473, %v2460, %v2474
        %vm2476 = vcmp.eq.s32.totalorder %v2471, 2
        %v2477 = vxor.u32 %v2460, 2147483648
        %v2478 = vsel %vm2476, %v2477, %v2468
        %v2479 = vsel %vm2472, %v2475, %v2478
        %v2480 = vsel %vm2469, nan, %v2479
        %v2481 = vand.u32 2147483647, %v306
        %vm2482 = vcmp.le.f32.partialorder %v2481, 0.7853982
        %vm2483 = vcmp.lt.s32.totalorder %v306, 0
        %v2484 = vand.u32 %v306, 2139095040
        %v2485 = vshrl.u32 %v2484, 23
        %v2486 = vsub.s32 %v2485, 127
        %v2487 = vand.u32 2147483647, %v306
        %v2488 = vand.u32 %v2487, 8388607
        %v2489 = vor.u32 %v2488, 8388608
        %v2490 = vsub.s32 0, %v2489
        %v2491 = vadd.s32 %v2486, 1
        %vm2492 = vcmp.gt.s32.totalorder %v2491, 0
        %v2493 = vsel %vm2492, %v2491, 0
        %v2494 = vshrl.u32 %v2493, 5
        %v2495 = vand.u32 %v2493, 31
        %v2496 = vsub.s32 32, %v2495
        %v2497 = vshrl.u32 683565275, %v2496
        %v2498 = vshll.u32 683565275, %v2495
        %v2499 = vshrl.u32 2475754826, %v2496
        %v2500 = vor.u32 %v2498, %v2499
        %v2501 = vshll.u32 2475754826, %v2495
        %v2502 = vshrl.u32 2131351028, %v2496
        %v2503 = vor.u32 %v2501, %v2502
        %v2504 = vshll.u32 2131351028, %v2495
        %v2505 = vshrl.u32 2102212464, %v2496
        %v2506 = vor.u32 %v2504, %v2505
        %v2507 = vshll.u32 2102212464, %v2495
        %v2508 = vshrl.u32 920167782, %v2496
        %v2509 = vor.u32 %v2507, %v2508
        %v2510 = vshll.u32 920167782, %v2495
        %v2511 = vshrl.u32 1326507024, %v2496
        %v2512 = vor.u32 %v2510, %v2511
        %vm2513 = vcmp.lt.s32.totalorder %v2494, 1
        %vm2514 = vcmp.lt.s32.totalorder %v2494, 2
        %vm2515 = vcmp.lt.s32.totalorder %v2494, 3
        %vm2516 = vcmp.lt.s32.totalorder %v2494, 4
        %v2517 = vsel %vm2513, %v2497, %v2500
        %v2518 = vsel %vm2516, %v2506, 2102212464
        %v2519 = vsel %vm2515, %v2503, %v2518
        %v2520 = vsel %vm2514, %v2517, %v2519
        %v2521 = vsel %vm2513, %v2500, %v2503
        %v2522 = vsel %vm2516, %v2509, 920167782
        %v2523 = vsel %vm2515, %v2506, %v2522
        %v2524 = vsel %vm2514, %v2521, %v2523
        %v2525 = vsel %vm2513, %v2503, %v2506
        %v2526 = vsel %vm2516, %v2512, 1326507024
        %v2527 = vsel %vm2515, %v2509, %v2526
        %v2528 = vsel %vm2514, %v2525, %v2527
        %v2529 = vshll.u32 %v2489, 8
        %v2530 = vand.u32 %v2529, 65535
        %v2531 = vshrl.u32 %v2529, 16
        %v2532 = vand.u32 %v2528, 65535
        %v2533 = vshrl.u32 %v2528, 16
        %v2534 = vmul.u32 %v2530, %v2532
        %v2535 = vmul.u32 %v2530, %v2533
        %v2536 = vmul.u32 %v2531, %v2532
        %v2537 = vmul.u32 %v2531, %v2533
        %v2538 = vshll.u32 %v2535, 16
        %v2539 = vshrl.u32 %v2535, 16
        %v2540 = vshll.u32 %v2536, 16
        %v2541 = vshrl.u32 %v2536, 16
        %vm2542 = vc.u32 %v2534, %v2538
        %v2543 = vsel %vm2542, 1, 0
        %v2544 = vadd.s32 %v2534, %v2538
        %v2545 = vadd.s32 %v2537, %v2543
        %vm2546 = vc.u32 %v2544, %v2540
        %v2547 = vsel %vm2546, 1, 0
        %v2548 = vadd.s32 %v2544, %v2540
        %v2549 = vadd.s32 %v2545, %v2547
        %v2550 = vadd.s32 %v2549, %v2539
        %v2551 = vadd.s32 %v2550, %v2541
        %v2552 = vand.u32 %v2529, 65535
        %v2553 = vshrl.u32 %v2529, 16
        %v2554 = vand.u32 %v2524, 65535
        %v2555 = vshrl.u32 %v2524, 16
        %v2556 = vmul.u32 %v2552, %v2554
        %v2557 = vmul.u32 %v2552, %v2555
        %v2558 = vmul.u32 %v2553, %v2554
        %v2559 = vmul.u32 %v2553, %v2555
        %v2560 = vshll.u32 %v2557, 16
        %v2561 = vshrl.u32 %v2557, 16
        %v2562 = vshll.u32 %v2558, 16
        %v2563 = vshrl.u32 %v2558, 16
        %vm2564 = vc.u32 %v2556, %v2560
        %v2565 = vsel %vm2564, 1, 0
        %v2566 = vadd.s32 %v2556, %v2560
        %v2567 = vadd.s32 %v2559, %v2565
        %vm2568 = vc.u32 %v2566, %v2562
        %v2569 = vsel %vm2568, 1, 0
        %v2570 = vadd.s32 %v2566, %v2562
        %v2571 = vadd.s32 %v2567, %v2569
        %v2572 = vadd.s32 %v2571, %v2561
        %v2573 = vadd.s32 %v2572, %v2563
        %v2574 = vmul.u32 %v2529, %v2520
        %v2575 = vadd.s32 %v2551, %v2570
        %vm2576 = vc.u32 %v2551, %v2570
        %v2577 = vadd.s32 %v2573, 1
        %v2578 = vsel %vm2576, %v2577, %v2573
        %v2579 = vadd.s32 %v2574, %v2578
        %v2580 = vadd.s32 %v2579, 536870912
        %v2581 = vshrl.u32 %v2580, 30
        %v2582 = vshll.u32 %v2581, 30
        %v2583 = vsub.s32 %v2579, %v2582
        %vm2584 = vcmp.lt.s32.totalorder %v2583, 0
        %v2585 = vsub.s32 0, %v2583
        %v2586 = vsel %vm2584, %v2585, %v2583
        %v2587 = vclz %v2586
        %v2588 = vsub.s32 %v2587, 2
        %vm2589 = vcmp.gt.s32.totalorder 0, %v2588
        %v2590 = vsel %vm2589, 0, %v2588
        %v2591 = vsub.s32 32, %v2590
        %v2592 = vshll.u32 %v2583, %v2590
        %v2593 = vshrl.u32 %v2575, %v2591
        %v2594 = vor.u32 %v2592, %v2593
        %v2595 = vsub.s32 4294967266, %v2590
        %v2596 = vadd.s32 %v2595, 127
        %v2597 = vshll.u32 %v2596, 23
        %v2598 = vor.u32 4788187, %v2597
        %v2599 = vand.u32 2147483647, %v2598
        %v2601 = vcvt.s32.f32 %v2594
        %v2602 = vmul.f32 %v2601, %v2599
        %v2603 = vxor.u32 %v2602, 2147483648
        %v2604 = vsel %vm2483, %v2603, %v2602
        %v2605 = vsub.s32 4, %v2581
        %v2606 = vsel %vm2483, %v2605, %v2581
        %v2607 = vsel %vm2482, %v306, %v2604
        %v2608 = vsel %vm2482, 0, %v2606
        %v2609 = vmul.f32 %v2607, %v2607
        %v2610 = vmul.f32 %v2609, -0.001358992
        %v2611 = vadd.f32 %v2610, 0.041655596
        %v2612 = vmul.f32 %v2609, %v2611
        %v2613 = vadd.f32 %v2612, -0.4999988
        %v2614 = vmul.f32 %v2609, %v2613
        %v2615 = vadd.f32 1.0, %v2614
        %v2616 = vmul.f32 %v2607, %v2607
        %v2617 = vmul.f32 %v2616, -0.00019511016
        %v2618 = vadd.f32 %v2617, 0.008332121
        %v2619 = vmul.f32 %v2616, %v2618
        %v2620 = vadd.f32 %v2619, -0.16666654
        %v2621 = vmul.f32 %v2616, %v2620
        %v2622 = vadd.f32 %v2621, 1.0
        %v2623 = vmul.f32 %v2622, %v2607
        %vm2624 = vweird.f32 %v306
        %v2625 = vadd.s32 %v2608, 3
        %v2626 = vand.u32 %v2625, 3
        %vm2627 = vcmp.lt.s32.totalorder %v2626, 2
        %vm2628 = vcmp.eq.s32.totalorder %v2626, 0
        %v2629 = vxor.u32 %v2623, 2147483648
        %v2630 = vsel %vm2628, %v2615, %v2629
        %vm2631 = vcmp.eq.s32.totalorder %v2626, 2
        %v2632 = vxor.u32 %v2615, 2147483648
        %v2633 = vsel %vm2631, %v2632, %v2623
        %v2634 = vsel %vm2627, %v2630, %v2633
        %v2635 = vsel %vm2624, nan, %v2634
        %v2636 = vand.u32 2147483647, %v309
        %vm2637 = vcmp.le.f32.partialorder %v2636, 0.7853982
        %vm2638 = vcmp.lt.s32.totalorder %v309, 0
        %v2639 = vand.u32 %v309, 2139095040
        %v2640 = vshrl.u32 %v2639, 23
        %v2641 = vsub.s32 %v2640, 127
        %v2642 = vand.u32 2147483647, %v309
        %v2643 = vand.u32 %v2642, 8388607
        %v2644 = vor.u32 %v2643, 8388608
        %v2645 = vsub.s32 0, %v2644
        %v2646 = vadd.s32 %v2641, 1
        %vm2647 = vcmp.gt.s32.totalorder %v2646, 0
        %v2648 = vsel %vm2647, %v2646, 0
        %v2649 = vshrl.u32 %v2648, 5
        %v2650 = vand.u32 %v2648, 31
        %v2651 = vsub.s32 32, %v2650
        %v2652 = vshrl.u32 683565275, %v2651
        %v2653 = vshll.u32 683565275, %v2650
        %v2654 = vshrl.u32 2475754826, %v2651
        %v2655 = vor.u32 %v2653, %v2654
        %v2656 = vshll.u32 2475754826, %v2650
        %v2657 = vshrl.u32 2131351028, %v2651
        %v2658 = vor.u32 %v2656, %v2657
        %v2659 = vshll.u32 2131351028, %v2650
        %v2660 = vshrl.u32 2102212464, %v2651
        %v2661 = vor.u32 %v2659, %v2660
        %v2662 = vshll.u32 2102212464, %v2650
        %v2663 = vshrl.u32 920167782, %v2651
        %v2664 = vor.u32 %v2662, %v2663
        %v2665 = vshll.u32 920167782, %v2650
        %v2666 = vshrl.u32 1326507024, %v2651
        %v2667 = vor.u32 %v2665, %v2666
        %vm2668 = vcmp.lt.s32.totalorder %v2649, 1
        %vm2669 = vcmp.lt.s32.totalorder %v2649, 2
        %vm2670 = vcmp.lt.s32.totalorder %v2649, 3
        %vm2671 = vcmp.lt.s32.totalorder %v2649, 4
        %v2672 = vsel %vm2668, %v2652, %v2655
        %v2673 = vsel %vm2671, %v2661, 2102212464
        %v2674 = vsel %vm2670, %v2658, %v2673
        %v2675 = vsel %vm2669, %v2672, %v2674
        %v2676 = vsel %vm2668, %v2655, %v2658
        %v2677 = vsel %vm2671, %v2664, 920167782
        %v2678 = vsel %vm2670, %v2661, %v2677
        %v2679 = vsel %vm2669, %v2676, %v2678
        %v2680 = vsel %vm2668, %v2658, %v2661
        %v2681 = vsel %vm2671, %v2667, 1326507024
        %v2682 = vsel %vm2670, %v2664, %v2681
        %v2683 = vsel %vm2669, %v2680, %v2682
        %v2684 = vshll.u32 %v2644, 8
        %v2685 = vand.u32 %v2684, 65535
        %v2686 = vshrl.u32 %v2684, 16
        %v2687 = vand.u32 %v2683, 65535
        %v2688 = vshrl.u32 %v2683, 16
        %v2689 = vmul.u32 %v2685, %v2687
        %v2690 = vmul.u32 %v2685, %v2688
        %v2691 = vmul.u32 %v2686, %v2687
        %v2692 = vmul.u32 %v2686, %v2688
        %v2693 = vshll.u32 %v2690, 16
        %v2694 = vshrl.u32 %v2690, 16
        %v2695 = vshll.u32 %v2691, 16
        %v2696 = vshrl.u32 %v2691, 16
        %vm2697 = vc.u32 %v2689, %v2693
        %v2698 = vsel %vm2697, 1, 0
        %v2699 = vadd.s32 %v2689, %v2693
        %v2700 = vadd.s32 %v2692, %v2698
        %vm2701 = vc.u32 %v2699, %v2695
        %v2702 = vsel %vm2701, 1, 0
        %v2703 = vadd.s32 %v2699, %v2695
        %v2704 = vadd.s32 %v2700, %v2702
        %v2705 = vadd.s32 %v2704, %v2694
        %v2706 = vadd.s32 %v2705, %v2696
        %v2707 = vand.u32 %v2684, 65535
        %v2708 = vshrl.u32 %v2684, 16
        %v2709 = vand.u32 %v2679, 65535
        %v2710 = vshrl.u32 %v2679, 16
        %v2711 = vmul.u32 %v2707, %v2709
        %v2712 = vmul.u32 %v2707, %v2710
        %v2713 = vmul.u32 %v2708, %v2709
        %v2714 = vmul.u32 %v2708, %v2710
        %v2715 = vshll.u32 %v2712, 16
        %v2716 = vshrl.u32 %v2712, 16
        %v2717 = vshll.u32 %v2713, 16
        %v2718 = vshrl.u32 %v2713, 16
        %vm2719 = vc.u32 %v2711, %v2715
        %v2720 = vsel %vm2719, 1, 0
        %v2721 = vadd.s32 %v2711, %v2715
        %v2722 = vadd.s32 %v2714, %v2720
        %vm2723 = vc.u32 %v2721, %v2717
        %v2724 = vsel %vm2723, 1, 0
        %v2725 = vadd.s32 %v2721, %v2717
        %v2726 = vadd.s32 %v2722, %v2724
        %v2727 = vadd.s32 %v2726, %v2716
        %v2728 = vadd.s32 %v2727, %v2718
        %v2729 = vmul.u32 %v2684, %v2675
        %v2730 = vadd.s32 %v2706, %v2725
        %vm2731 = vc.u32 %v2706, %v2725
        %v2732 = vadd.s32 %v2728, 1
        %v2733 = vsel %vm2731, %v2732, %v2728
        %v2734 = vadd.s32 %v2729, %v2733
        %v2735 = vadd.s32 %v2734, 536870912
        %v2736 = vshrl.u32 %v2735, 30
        %v2737 = vshll.u32 %v2736, 30
        %v2738 = vsub.s32 %v2734, %v2737
        %vm2739 = vcmp.lt.s32.totalorder %v2738, 0
        %v2740 = vsub.s32 0, %v2738
        %v2741 = vsel %vm2739, %v2740, %v2738
        %v2742 = vclz %v2741
        %v2743 = vsub.s32 %v2742, 2
        %vm2744 = vcmp.gt.s32.totalorder 0, %v2743
        %v2745 = vsel %vm2744, 0, %v2743
        %v2746 = vsub.s32 32, %v2745
        %v2747 = vshll.u32 %v2738, %v2745
        %v2748 = vshrl.u32 %v2730, %v2746
        %v2749 = vor.u32 %v2747, %v2748
        %v2750 = vsub.s32 4294967266, %v2745
        %v2751 = vadd.s32 %v2750, 127
        %v2752 = vshll.u32 %v2751, 23
        %v2753 = vor.u32 4788187, %v2752
        %v2754 = vand.u32 2147483647, %v2753
        %v2756 = vcvt.s32.f32 %v2749
        %v2757 = vmul.f32 %v2756, %v2754
        %v2758 = vxor.u32 %v2757, 2147483648
        %v2759 = vsel %vm2638, %v2758, %v2757
        %v2760 = vsub.s32 4, %v2736
        %v2761 = vsel %vm2638, %v2760, %v2736
        %v2762 = vsel %vm2637, %v309, %v2759
        %v2763 = vsel %vm2637, 0, %v2761
        %v2764 = vmul.f32 %v2762, %v2762
        %v2765 = vmul.f32 %v2764, -0.001358992
        %v2766 = vadd.f32 %v2765, 0.041655596
        %v2767 = vmul.f32 %v2764, %v2766
        %v2768 = vadd.f32 %v2767, -0.4999988
        %v2769 = vmul.f32 %v2764, %v2768
        %v2770 = vadd.f32 1.0, %v2769
        %v2771 = vmul.f32 %v2762, %v2762
        %v2772 = vmul.f32 %v2771, -0.00019511016
        %v2773 = vadd.f32 %v2772, 0.008332121
        %v2774 = vmul.f32 %v2771, %v2773
        %v2775 = vadd.f32 %v2774, -0.16666654
        %v2776 = vmul.f32 %v2771, %v2775
        %v2777 = vadd.f32 %v2776, 1.0
        %v2778 = vmul.f32 %v2777, %v2762
        %vm2779 = vweird.f32 %v309
        %v2780 = vadd.s32 %v2763, 3
        %v2781 = vand.u32 %v2780, 3
        %vm2782 = vcmp.lt.s32.totalorder %v2781, 2
        %vm2783 = vcmp.eq.s32.totalorder %v2781, 0
        %v2784 = vxor.u32 %v2778, 2147483648
        %v2785 = vsel %vm2783, %v2770, %v2784
        %vm2786 = vcmp.eq.s32.totalorder %v2781, 2
        %v2787 = vxor.u32 %v2770, 2147483648
        %v2788 = vsel %vm2786, %v2787, %v2778
        %v2789 = vsel %vm2782, %v2785, %v2788
        %v2790 = vsel %vm2779, nan, %v2789
        %2791 = vst [vmem:[%s164] sm:$0xff] %v465
        %2792 = vst [vmem:[%s164 + $0x8] sm:$0xff] %v620
        %2793 = vst [vmem:[%s164 + $0x10] sm:$0xff] %v775
        %2794 = vst [vmem:[%s164 + $0x18] sm:$0xff] %v930
        %2795 = vst [vmem:[%s164 + $0x20] sm:$0xff] %v1085
        %2796 = vst [vmem:[%s164 + $0x28] sm:$0xff] %v1240
        %2797 = vst [vmem:[%s164 + $0x30] sm:$0xff] %v1395
        %2798 = vst [vmem:[%s164 + $0x38] sm:$0xff] %v1550
        %2799 = vst [vmem:[%s164 + $0x40] sm:$0xff] %v1705
        %2800 = vst [vmem:[%s164 + $0x48] sm:$0xff] %v1860
        %2801 = vst [vmem:[%s164 + $0x50] sm:$0xff] %v2015
        %2802 = vst [vmem:[%s164 + $0x58] sm:$0xff] %v2170
        %2803 = vst [vmem:[%s164 + $0x60] sm:$0xff] %v2325
        %2804 = vst [vmem:[%s164 + $0x68] sm:$0xff] %v2480
        %2805 = vst [vmem:[%s164 + $0x70] sm:$0xff] %v2635
        %2806 = vst [vmem:[%s164 + $0x78] sm:$0xff] %v2790
        %s2807 = sand.u32 %s93, 1
        %s2808 = scalar_lea.sflag [#allocation3], %s2807
        %s2809 = sand.u32 %s93, 1
        %s2810 = smul.addr %s2809, 128
        %s2811 = scalar_lea.vmem [#allocation2], %s2810
        // Predicated region
        $region33: #{tpu_custom_call.1} parent=31 // pred_check
          %p2812 = pneg %p103
        $region34: #{tpu_custom_call.1} parent=31 // pred_check_branch
          %2814 = sbr.rel (%p2812) target = $region36
        $region35: #{tpu_custom_call.1} parent=31 // pred_region
          %s2815 = smul.u32 16, %s17
          %2817 = vsyncadd %s2808, 0
          %s2818 = smul.addr %s2815, 8
          %s2819 = scalar_lea.hbm %s3, %s2818
          %s2820 = sshll.u32 %s2811, 4
          %s2821 = int_to_ptr.vmem [resolvable:$true] %s2820
          %s2822 = sshll.u32 %s2819, 4
          %s2823 = int_to_ptr.hbm [resolvable:$true] %s2822
          %2828 = dma.vmem_to_hbm [thread:$0]  %s2821, 2048, %s2823, %s2808, 128, 128, 8
        $region36: #{tpu_custom_call.1} parent=31 // pred_fallthru
          _
      $region32: #{tpu_custom_call.1} parent=5 // pred_fallthru
        _
      %p2829 = scmp.le.s32.totalorder 2, %s12
      // Predicated region
      $region37: #{tpu_custom_call.1} parent=5 // pred_check
        %p2830 = pneg %p2829
      $region38: #{tpu_custom_call.1} parent=5 // pred_check_branch
        %2832 = sbr.rel (%p2830) target = $region40
      $region39: #{tpu_custom_call.1} parent=5 // pred_region
        %s2833 = ssub.s32 %s12, 2
        // Predicated region
        $region41: #{tpu_custom_call.1} parent=39 // pred_check
          %p2834 = pneg %p109
        $region42: #{tpu_custom_call.1} parent=39 // pred_check_branch
          %2836 = sbr.rel (%p2834) target = $region44
        $region43: #{tpu_custom_call.1} parent=39 // pred_region
          %s2837 = sand.u32 %s94, 1
          %s2838 = scalar_lea.sflag [#allocation3], %s2837
          %s2839 = sand.u32 %s94, 1
          %s2840 = smul.addr %s2839, 128
          %s2841 = scalar_lea.vmem [#allocation2], %s2840
          %2843 = dma.done %s2838, 2048
        $region44: #{tpu_custom_call.1} parent=39 // pred_fallthru
          _
      $region40: #{tpu_custom_call.1} parent=5 // pred_fallthru
        _
    $region6: #{tpu_custom_call.1} parent=1 // loop_footer
      %s16 = sadd.s32 1, %s12
    $region7: #{tpu_custom_call.1} parent=1 // loop_footer_branch
      %11 = sbr.rel target = $region3
    $region8: #{tpu_custom_call.1} parent=1 // loop_exit
      _
    %2844 = vsyncpa [#allocation3], 1
    %s2845 = scalar_lea.sflag [#allocation3], 1
    %2846 = vsyncpa %s2845, 1

</llo_original>
